<compile_context>
chip_gen: v7x
topology: tpu7x:2x2x1
jax: 0.10.0
libtpu: 0.0.40
codegen_flags: <defaults>
</compile_context>

<pallas_src>
import functools

import jax
import jax.numpy as jnp
from jax.experimental import pallas as pl
from jax.experimental.pallas import tpu as pltpu


# ----------------------------------------------------------------------------
# Kernels
# ----------------------------------------------------------------------------

def mlp_kernel_resident(x_ref, w1_ref, w2_ref, o_ref):
    """Both weights fully VMEM-resident; 1-D grid over M."""
    # In-kernel activation cast (e.g. f32 -> bf16): avoids a separate un-hidden
    # XLA cast pass and the extra HBM round-trip for x.
    x = x_ref[...].astype(w1_ref.dtype)
    # fc_1 on the MXU, f32 accumulation.
    h = jnp.dot(x, w1_ref[...], preferred_element_type=jnp.float32)
    # ReLU in f32 on the VPU (v5e has no bf16 VPU path).
    h = jnp.maximum(h, 0.0)
    # fc_2: cast accumulator to the weight dtype for the MXU, f32 accumulate.
    y = jnp.dot(h.astype(w2_ref.dtype), w2_ref[...],
                preferred_element_type=jnp.float32)
    o_ref[...] = y.astype(o_ref.dtype)


def mlp_kernel_tiled(x_ref, w1_ref, w2_ref, o_ref, acc_ref):
    """Large-H path: the 2H feature axis is tiled; fc_2 reduces over it.

    Grid = (M tiles, 2H tiles); the feature axis is last and 'arbitrary'.
    acc_ref is a persistent f32 VMEM accumulator for the output tile.
    """
    k = pl.program_id(1)

    @pl.when(k == 0)
    def _():
        acc_ref[...] = jnp.zeros_like(acc_ref)

    x = x_ref[...].astype(w1_ref.dtype)
    h = jnp.dot(x, w1_ref[...], preferred_element_type=jnp.float32)  # (tm, tn2)
    h = jnp.maximum(h, 0.0)
    acc_ref[...] += jnp.dot(h.astype(w2_ref.dtype), w2_ref[...],
                            preferred_element_type=jnp.float32)

    @pl.when(k == pl.num_programs(1) - 1)
    def _():
        o_ref[...] = acc_ref[...].astype(o_ref.dtype)


# ----------------------------------------------------------------------------
# Wrapper
# ----------------------------------------------------------------------------

def prepare_params(w1, w2, compute_dtype=jnp.bfloat16):
    """Transpose torch-layout [out, in] weights to [in, out] and cast ONCE.

    Call outside the per-step hot path (e.g. at model init) so no HBM
    transpose/cast is materialized on every forward.
    """
    return (jnp.asarray(w1.T, dtype=compute_dtype),
            jnp.asarray(w2.T, dtype=compute_dtype))


def _vmem_capacity_bytes():
    try:
        return int(pltpu.get_tpu_info().vmem_capacity_bytes)
    except Exception:
        return 64 << 20  # conservative floor (v7x per-TensorCore size)


def _resident_weight_spec(shape, index_map):
    """Constant-index resident weight spec, single-buffered when supported.

    Returns (spec, n_buffers) so the VMEM budget can stay consistent even if
    this jax version lacks BlockSpec(pipeline_mode=...).
    """
    try:
        return pl.BlockSpec(shape, index_map, pipeline_mode=pl.Buffered(1)), 1
    except TypeError:
        return pl.BlockSpec(shape, index_map), 2


def mlp_forward(x, w1_t, w2_t, *, tm=None, tn2=None, out_dtype=None,
                force_tiled=False):
    """x: [M, H]; w1_t: [H, 2H], w2_t: [2H, H] pre-prepared ([in, out], bf16)."""
    M, H = x.shape
    H2 = w1_t.shape[1]
    assert w1_t.shape == (H, H2) and w2_t.shape == (H2, H)
    out_dtype = out_dtype or x.dtype

    x_isz = jnp.dtype(x.dtype).itemsize
    w_isz = jnp.dtype(w1_t.dtype).itemsize
    o_isz = jnp.dtype(out_dtype).itemsize

    vmem_cap = _vmem_capacity_bytes()
    # Headroom for Mosaic internal scratch / semaphores / pipeline state:
    # 64 MiB (v7x) -> 56 MiB budget, 128 MiB (v5e/v6e) -> 112 MiB budget.
    vmem_budget = vmem_cap - max(8 << 20, vmem_cap // 8)
    dual_tc = vmem_cap <= (64 << 20)  # v7x heuristic (64 MiB per TensorCore)

    # ---- M tile --------------------------------------------------------------
    if tm is None:
        # v7x: 256 matches the 256x256 MXU and the tighter per-TC VMEM;
        # v5e/v6e: bigger tiles amortize the ~0.35us/step grid overhead.
        tm = 256 if dual_tc else 512
    tm = min(tm, M)
    if tm < M:
        tm = max(8, (tm // 256) * 256 if tm >= 256 else (tm // 8) * 8)
    grid_m = pl.cdiv(M, tm)
    # v7x megacore: prefer an even number of M steps so both TCs stay busy.
    if dual_tc and grid_m > 1 and grid_m % 2 == 1 and tm >= 512:
        tm //= 2
        grid_m = pl.cdiv(M, tm)

    flops = 2 * M * H * H2 + 2 * M * H2 * H  # two GEMMs
    weights_bytes = (H * H2 + H2 * H) * w_isz

    # ---- resident-weights path ------------------------------------------------
    w1_spec, n1 = _resident_weight_spec((H, H2), lambda i: (0, 0))
    w2_spec, n2 = _resident_weight_spec((H2, H), lambda i: (0, 0))
    resident_need = (
        2 * tm * H * x_isz                      # x tile, double-buffered
        + 2 * tm * H * o_isz                    # out tile, double-buffered
        + (n1 * H * H2 + n2 * H2 * H) * w_isz   # resident weights
        + tm * H2 * 4 + tm * H * 4              # f32 h / y intermediates
        + (4 << 20)                             # misc headroom
    )
    use_tiled = force_tiled or resident_need > vmem_budget

    if not use_tiled:
        vmem_bytes = int(min(max(resident_need, 16 << 20), vmem_budget))
        cost = pl.CostEstimate(
            flops=flops, transcendentals=0,
            bytes_accessed=(M * H * x_isz + weights_bytes + M * H * o_isz))
        return pl.pallas_call(
            mlp_kernel_resident,
            out_shape=jax.ShapeDtypeStruct((M, H), out_dtype),
            grid_spec=pltpu.PrefetchScalarGridSpec(
                num_scalar_prefetch=0,
                grid=(grid_m,),
                in_specs=[
                    pl.BlockSpec((tm, H), lambda i: (i, 0)),  # x tile over M
                    w1_spec,                                  # W1^T resident
                    w2_spec,                                  # W2^T resident
                ],
                out_specs=pl.BlockSpec((tm, H), lambda i: (i, 0)),
            ),
            compiler_params=pltpu.CompilerParams(
                dimension_semantics=("parallel",),
                vmem_limit_bytes=vmem_bytes,
            ),
            cost_estimate=cost,
        )(x, w1_t, w2_t)

    # ---- large-H tiled path: stream weight slices, reduce the 2H axis ---------
    if tn2 is None:
        tn2 = 512
    tn2 = min(tn2, H2)
    # tn2 must divide H2 exactly (a partial reduction block would pollute the
    # accumulation) and stay a multiple of 128 (lane width).
    while tn2 > 128 and (H2 % tn2 != 0 or tn2 % 128 != 0):
        tn2 -= 128
    if H2 % tn2 != 0:
        tn2 = H2
    grid_k = H2 // tn2

    tiled_need = (
        2 * tm * H * x_isz
        + 2 * tm * H * o_isz
        + 2 * (H * tn2 + tn2 * H) * w_isz   # streamed weight slices, double-buffered
        + tm * H * 4                        # f32 accumulator scratch
        + tm * tn2 * 4                      # f32 h slice
        + (4 << 20)
    )
    vmem_bytes = int(min(max(tiled_need, 16 << 20), vmem_budget))
    cost = pl.CostEstimate(
        flops=flops, transcendentals=0,
        bytes_accessed=(M * H * x_isz + grid_m * weights_bytes + M * H * o_isz))
    return pl.pallas_call(
        mlp_kernel_tiled,
        out_shape=jax.ShapeDtypeStruct((M, H), out_dtype),
        grid_spec=pltpu.PrefetchScalarGridSpec(
            num_scalar_prefetch=0,
            grid=(grid_m, grid_k),
            in_specs=[
                pl.BlockSpec((tm, H), lambda i, k: (i, 0)),   # x (constant over k)
                pl.BlockSpec((H, tn2), lambda i, k: (0, k)),  # W1^T column slice
                pl.BlockSpec((tn2, H), lambda i, k: (k, 0)),  # W2^T row slice
            ],
            out_specs=pl.BlockSpec((tm, H), lambda i, k: (i, 0)),
            scratch_shapes=[pltpu.VMEM((tm, H), jnp.float32)],
        ),
        compiler_params=pltpu.CompilerParams(
            dimension_semantics=("parallel", "arbitrary"),
            vmem_limit_bytes=vmem_bytes,
        ),
        cost_estimate=cost,
    )(x, w1_t, w2_t)


# ----------------------------------------------------------------------------
# Self-test
# ----------------------------------------------------------------------------

if __name__ == "__main__":
    # Small, (8,128)-friendly stand-in shapes for the module (spec uses H=1024).
    hidden_size = 256
    M = 512  # batch*seq rows flattened -> >=2 grid steps at tm=256

    key = jax.random.PRNGKey(0)
    kx, k1, k2 = jax.random.split(key, 3)

    x = jax.random.normal(kx, (M, hidden_size), dtype=jnp.float32)
    # torch nn.Linear weight layout is [out, in].
    w1 = jax.random.normal(k1, (2 * hidden_size, hidden_size), dtype=jnp.float32) * 0.02
    w2 = jax.random.normal(k2, (hidden_size, 2 * hidden_size), dtype=jnp.float32) * 0.02

    # One-time weight prep (transpose + bf16 cast) outside the hot path.
    w1_t, w2_t = prepare_params(w1, w2)

    # Resident-weights path (default for small/medium H).
    fwd = jax.jit(mlp_forward)
    out = jax.block_until_ready(fwd(x, w1_t, w2_t))
    assert out.shape == (M, hidden_size)

    # Large-H tiled-reduction path, forced so it is exercised at test size too.
    fwd_tiled = jax.jit(functools.partial(mlp_forward, force_tiled=True, tn2=256))
    out_tiled = jax.block_until_ready(fwd_tiled(x, w1_t, w2_t))
    assert out_tiled.shape == (M, hidden_size)

    # Reference mirroring the kernel's mixed precision (bf16 operands, f32 accum).
    xb = x.astype(jnp.bfloat16)
    h_ref = jnp.maximum(jnp.dot(xb, w1_t, preferred_element_type=jnp.float32), 0.0)
    ref = jnp.dot(h_ref.astype(jnp.bfloat16), w2_t, preferred_element_type=jnp.float32)
    assert jnp.allclose(out, ref, atol=1e-2, rtol=1e-2), "resident path mismatch"
    assert jnp.allclose(out_tiled, ref, atol=2e-2, rtol=2e-2), "tiled path mismatch"

    # Loose sanity check against exact f32 torch semantics.
    # TODO(synk): bf16 operands deviate from bit-exact f32 nn.Linear semantics;
    # pass compute_dtype=jnp.float32 to prepare_params for exact-precision mode.
    ref_f32 = jnp.maximum(x @ w1.T, 0.0) @ w2.T
    assert jnp.allclose(out, ref_f32, atol=5e-2, rtol=5e-2), "mismatch vs f32 reference"

    print("KERNEL_OK")
</pallas_src>

<mosaic_0001>
module attributes {stable_mosaic.version = 11 : i64} {
  func.func @mlp_kernel_resident(%arg0: i32, %arg1: memref<256x256xf32, #tpu.memory_space<vmem>>, %arg2: memref<256x512xbf16, #tpu.memory_space<vmem>>, %arg3: memref<512x256xbf16, #tpu.memory_space<vmem>>, %arg4: memref<256x256xf32, #tpu.memory_space<vmem>>) attributes {dimension_semantics = [#tpu.dimension_semantics<parallel>], iteration_bounds = array<i64: 2>, scalar_prefetch = 0 : i64, scratch_operands = 0 : i64, tpu.core_type = #tpu.core_type<tc>, window_params = [{transform_indices = @transform_0, window_bounds = array<i64: 256, 256>}, {pipeline_mode = #tpu.pipeline_mode<synchronous>, transform_indices = @transform_1, window_bounds = array<i64: 256, 512>}, {pipeline_mode = #tpu.pipeline_mode<synchronous>, transform_indices = @transform_2, window_bounds = array<i64: 512, 256>}, {transform_indices = @transform_3, window_bounds = array<i64: 256, 256>}]} {
    %c0 = arith.constant 0 : index
    %c0_0 = arith.constant 0 : index
    %0 = vector.load %arg1[%c0, %c0_0] : memref<256x256xf32, #tpu.memory_space<vmem>>, vector<256x256xf32>
    %1 = arith.truncf %0 : vector<256x256xf32> to vector<256x256xbf16>
    %c0_1 = arith.constant 0 : index
    %c0_2 = arith.constant 0 : index
    %2 = vector.load %arg2[%c0_1, %c0_2] : memref<256x512xbf16, #tpu.memory_space<vmem>>, vector<256x512xbf16>
    %cst = arith.constant dense<0.000000e+00> : vector<256x512xf32>
    %3 = tpu.matmul %1, %2, %cst {dimension_numbers = #tpu.dot_dimension_numbers<[1], [0], [0], [1], [0, 0, 1, 1], [], []>} : vector<256x256xbf16>, vector<256x512xbf16>, vector<256x512xf32> -> vector<256x512xf32>
    %cst_3 = arith.constant 0.000000e+00 : f32
    %4 = vector.broadcast %cst_3 : f32 to vector<256x512xf32>
    %5 = arith.maximumf %3, %4 : vector<256x512xf32>
    %6 = arith.truncf %5 : vector<256x512xf32> to vector<256x512xbf16>
    %c0_4 = arith.constant 0 : index
    %c0_5 = arith.constant 0 : index
    %7 = vector.load %arg3[%c0_4, %c0_5] : memref<512x256xbf16, #tpu.memory_space<vmem>>, vector<512x256xbf16>
    %cst_6 = arith.constant dense<0.000000e+00> : vector<256x256xf32>
    %8 = tpu.matmul %6, %7, %cst_6 {dimension_numbers = #tpu.dot_dimension_numbers<[1], [0], [0], [1], [0, 0, 1, 1], [], []>} : vector<256x512xbf16>, vector<512x256xbf16>, vector<256x256xf32> -> vector<256x256xf32>
    %c0_7 = arith.constant 0 : index
    %c0_8 = arith.constant 0 : index
    %9 = vector.load %arg4[%c0_7, %c0_8] : memref<256x256xf32, #tpu.memory_space<vmem>>, vector<256x256xf32>
    tpu.vector_store %arg4[%c0_7, %c0_8], %8 {strides = array<i32>} : memref<256x256xf32, #tpu.memory_space<vmem>>, vector<256x256xf32>,
    return
  }
  func.func @transform_0(%arg0: i32) -> (i32, i32) {
    %c0_i32 = arith.constant 0 : i32
    %c0_i32_0 = arith.constant 0 : i32
    return %arg0, %c0_i32 : i32, i32
  }
  func.func @transform_1(%arg0: i32) -> (i32, i32) {
    %c0_i32 = arith.constant 0 : i32
    %c0_i32_0 = arith.constant 0 : i32
    %c0_i32_1 = arith.constant 0 : i32
    return %c0_i32, %c0_i32_0 : i32, i32
  }
  func.func @transform_2(%arg0: i32) -> (i32, i32) {
    %c0_i32 = arith.constant 0 : i32
    %c0_i32_0 = arith.constant 0 : i32
    %c0_i32_1 = arith.constant 0 : i32
    return %c0_i32, %c0_i32_0 : i32, i32
  }
  func.func @transform_3(%arg0: i32) -> (i32, i32) {
    %c0_i32 = arith.constant 0 : i32
    %c0_i32_0 = arith.constant 0 : i32
    return %arg0, %c0_i32 : i32, i32
  }
}

</mosaic_0001>

<llo_original>
// kernel: mlp_forward.1
$region0: #{mlp_forward.1}
  #allocation0 [shape = 'u32[]', space=smem, size = 0x4, offset = 0x4, fixed_abs, tag = 'smem constant byte address 0x4 - core index']
  #allocation1 [shape = 'u32[144,128]{1,0:T(1,128)}', space=vmem, size = 0x12000, scoped, tag = 'internal scratch']
  %s0 = inlined_call_operand.hbm [shape: f32[512,256], index: 0, kind: input, shape index: {}]
  %s1 = inlined_call_operand.hbm [shape: bf16[256,512], index: 1, kind: input, shape index: {}]
  %s2 = inlined_call_operand.hbm [shape: bf16[512,256], index: 2, kind: input, shape index: {}]
  %s3 = inlined_call_operand.hbm [shape: f32[512,256], index: 3, kind: output, shape index: {}]
  %s4 = sld [smem:[#allocation0]]
  $region57: #{mlp_forward.1} parent=0
    _
  %s6 = ssub.s32 1, %s4
  %s7 = scalar_select 0, %s6, %s4
  $region1: #{mlp_forward.1} parent=0
    #allocation2 [shape = 'u8[524288]{0}', space=vmem, size = 0x80000, scoped, tag = 'input window, operand 0']
    #allocation3 [shape = 's32[2]{0}', space=sflag, size = 0x8, scoped, tag = 'scoped memory for mlp_forward.1']
    #allocation4 [shape = 's32[2]{0}', space=sflag, size = 0x8, scoped, tag = 'scoped memory for mlp_forward.1']
    #allocation5 [shape = 'u8[262144]{0}', space=vmem, size = 0x40000, scoped, tag = 'input window, operand 1, single buffered']
    #allocation6 [shape = 's32[1]{0}', space=sflag, size = 0x4, scoped, tag = 'scoped memory for mlp_forward.1']
    #allocation7 [shape = 'u8[262144]{0}', space=vmem, size = 0x40000, scoped, tag = 'input window, operand 2, single buffered']
    #allocation8 [shape = 'u8[524288]{0}', space=vmem, size = 0x80000, scoped, tag = 'output window, operand 0']
    %8 = vsyncpa [#allocation3], 0
    %s9 = scalar_lea.sflag [#allocation3], 1
    %10 = vsyncpa %s9, 0
    %11 = vsyncpa [#allocation6], 0
    %12 = vsyncpa [#allocation4], 0
    %s13 = scalar_lea.sflag [#allocation4], 1
    %14 = vsyncpa %s13, 0
    loop: start=0, step=1, limit=4
    $region2: #{mlp_forward.1} parent=1 // loop_pre_header
      _
    $region3: #{mlp_forward.1} parent=1 // loop_header
      %s16 = sphi 0, %s20
      %p17 = scmp.ge.s32.totalorder %s16, 4
      %s26 = sphi 0, %s28
      %s29 = sphi 0, %s26
      %s30 = sphi 0, %s29
      %s46 = sphi 0, %s30
      %s50 = sphi 0, %s50
      %s52 = sphi 0, %s50
      %s53 = sphi 0, %s52
      %s67 = sphi 0, %s53
      %s71 = sphi 0, %s71
      %s73 = sphi 0, %s71
      %s74 = sphi 0, %s73
      %s88 = sphi 0, %s74
      %s94 = sphi 0, %s96
      %s97 = sphi 0, %s94
      %s98 = sphi 0, %s97
      %s114 = sphi 0, %s98
    $region4: #{mlp_forward.1} parent=1 // loop_header_branch
      %19 = sbr.rel (%p17) target = $region8
    $region5: #{mlp_forward.1} parent=1 // loop_body
      %s21 = ssub.s32 %s16, 1
      %s22 = ssub.s32 %s16, 2
      %s23 = sadd.s32 %s16, 1
      %s24 = ssub.s32 %s16, %s23
      %p25 = scmp.eq.s32.totalorder %s24, 0
      %s27 = sadd.s32 %s26, 1
      %s28 = scalar_select %p25, %s26, %s27
      %p31 = pneg %p25
      %p32 = scmp.eq.s32.totalorder %s16, 1
      %p33 = por %p31, %p32
      %p34 = scmp.ne.s32.totalorder %s26, %s29
      %p35 = scmp.eq.s32.totalorder %s16, 0
      %p36 = por %p34, %p35
      %p37 = scmp.ne.s32.totalorder %s26, %s29
      %p38 = scmp.eq.s32.totalorder %s21, 1
      %p39 = por %p37, %p38
      %p40 = scmp.ne.s32.totalorder %s29, %s30
      %p41 = scmp.eq.s32.totalorder %s21, 0
      %p42 = por %p40, %p41
      %p43 = scmp.ne.s32.totalorder %s29, %s30
      %p44 = scmp.eq.s32.totalorder %s22, 1
      %p45 = por %p43, %p44
      %p47 = scmp.ne.s32.totalorder %s30, %s46
      %p48 = scmp.eq.s32.totalorder %s22, 0
      %p49 = por %p47, %p48
      %s51 = sadd.s32 %s50, 1
      %p54 = scmp.eq.s32.totalorder %s16, 1
      %p55 = scmp.ne.s32.totalorder %s50, %s52
      %p56 = scmp.eq.s32.totalorder %s16, 0
      %p57 = por %p55, %p56
      %p58 = scmp.ne.s32.totalorder %s50, %s52
      %p59 = scmp.eq.s32.totalorder %s21, 1
      %p60 = por %p58, %p59
      %p61 = scmp.ne.s32.totalorder %s52, %s53
      %p62 = scmp.eq.s32.totalorder %s21, 0
      %p63 = por %p61, %p62
      %p64 = scmp.ne.s32.totalorder %s52, %s53
      %p65 = scmp.eq.s32.totalorder %s22, 1
      %p66 = por %p64, %p65
      %p68 = scmp.ne.s32.totalorder %s53, %s67
      %p69 = scmp.eq.s32.totalorder %s22, 0
      %p70 = por %p68, %p69
      %s72 = sadd.s32 %s71, 1
      %p75 = scmp.eq.s32.totalorder %s16, 1
      %p76 = scmp.ne.s32.totalorder %s71, %s73
      %p77 = scmp.eq.s32.totalorder %s16, 0
      %p78 = por %p76, %p77
      %p79 = scmp.ne.s32.totalorder %s71, %s73
      %p80 = scmp.eq.s32.totalorder %s21, 1
      %p81 = por %p79, %p80
      %p82 = scmp.ne.s32.totalorder %s73, %s74
      %p83 = scmp.eq.s32.totalorder %s21, 0
      %p84 = por %p82, %p83
      %p85 = scmp.ne.s32.totalorder %s73, %s74
      %p86 = scmp.eq.s32.totalorder %s22, 1
      %p87 = por %p85, %p86
      %p89 = scmp.ne.s32.totalorder %s74, %s88
      %p90 = scmp.eq.s32.totalorder %s22, 0
      %p91 = por %p89, %p90
      %s92 = ssub.s32 %s16, %s23
      %p93 = scmp.eq.s32.totalorder %s92, 0
      %s95 = sadd.s32 %s94, 1
      %s96 = scalar_select %p93, %s94, %s95
      %p99 = pneg %p93
      %p100 = scmp.eq.s32.totalorder %s16, 1
      %p101 = por %p99, %p100
      %p102 = scmp.ne.s32.totalorder %s94, %s97
      %p103 = scmp.eq.s32.totalorder %s16, 0
      %p104 = por %p102, %p103
      %p105 = scmp.ne.s32.totalorder %s94, %s97
      %p106 = scmp.eq.s32.totalorder %s21, 1
      %p107 = por %p105, %p106
      %p108 = scmp.ne.s32.totalorder %s97, %s98
      %p109 = scmp.eq.s32.totalorder %s21, 0
      %p110 = por %p108, %p109
      %p111 = scmp.ne.s32.totalorder %s97, %s98
      %p112 = scmp.eq.s32.totalorder %s22, 1
      %p113 = por %p111, %p112
      %p115 = scmp.ne.s32.totalorder %s98, %s114
      %p116 = scmp.eq.s32.totalorder %s22, 0
      %p117 = por %p115, %p116
      %p118 = scmp.le.s32.totalorder 1, %s16
      %p119 = scmp.lt.s32.totalorder %s16, 3
      %p120 = pnand %p118, %p119
      %p121 = pneg %p120
      // Predicated region
      $region9: #{mlp_forward.1} parent=5 // pred_check
        _
      $region10: #{mlp_forward.1} parent=5 // pred_check_branch
        %123 = sbr.rel (%p120) target = $region12
      $region11: #{mlp_forward.1} parent=5 // pred_region
        %s124 = ssub.s32 %s16, 1
        // Predicated region
        $region13: #{mlp_forward.1} parent=11 // pred_check
          %p125 = pneg %p63
        $region14: #{mlp_forward.1} parent=11 // pred_check_branch
          %127 = sbr.rel (%p125) target = $region16
        $region15: #{mlp_forward.1} parent=11 // pred_region
          %s129 = ssub.s32 8192, 8192
          %130 = vsyncadd [#allocation6], %s129
          %s131 = sshll.u32 [#allocation5], 4
          %s132 = int_to_ptr.vmem [resolvable:$true] %s131
          %137 = dma.hbm_to_vmem [thread:$0]  %s1, 8192, %s132, [#allocation6], 256, 256, 16
        $region16: #{mlp_forward.1} parent=11 // pred_fallthru
          _
        // Predicated region
        $region17: #{mlp_forward.1} parent=11 // pred_check
          %p138 = pneg %p84
        $region18: #{mlp_forward.1} parent=11 // pred_check_branch
          %140 = sbr.rel (%p138) target = $region20
        $region19: #{mlp_forward.1} parent=11 // pred_region
          %s142 = ssub.s32 8192, 8192
          %143 = vsyncadd [#allocation6], %s142
          %s144 = sshll.u32 [#allocation7], 4
          %s145 = int_to_ptr.vmem [resolvable:$true] %s144
          %150 = dma.hbm_to_vmem [thread:$0]  %s2, 8192, %s145, [#allocation6], 128, 128, 8
        $region20: #{mlp_forward.1} parent=11 // pred_fallthru
          _
      $region12: #{mlp_forward.1} parent=5 // pred_fallthru
        _
      %p151 = scmp.lt.s32.totalorder %s16, 2
      // Predicated region
      $region21: #{mlp_forward.1} parent=5 // pred_check
        %p152 = pneg %p151
      $region22: #{mlp_forward.1} parent=5 // pred_check_branch
        %154 = sbr.rel (%p152) target = $region24
      $region23: #{mlp_forward.1} parent=5 // pred_region
        // Predicated region
        $region25: #{mlp_forward.1} parent=23 // pred_check
          %p155 = pneg %p36
        $region26: #{mlp_forward.1} parent=23 // pred_check_branch
          %157 = sbr.rel (%p155) target = $region28
        $region27: #{mlp_forward.1} parent=23 // pred_region
          %s158 = sand.u32 %s26, 1
          %s159 = scalar_lea.sflag [#allocation3], %s158
          %s160 = sand.u32 %s26, 1
          %s161 = smul.addr %s160, 512
          %s162 = scalar_lea.vmem [#allocation2], %s161
          %s163 = smul.u32 32, %s16
          %s165 = ssub.s32 8192, 8192
          %166 = vsyncadd %s159, %s165
          %s167 = smul.addr %s163, 2
          %s168 = smul.addr %s167, 128
          %s169 = scalar_lea.hbm %s0, %s168
          %s170 = sshll.u32 %s162, 4
          %s171 = int_to_ptr.vmem [resolvable:$true] %s170
          %176 = dma.hbm_to_vmem [thread:$0]  %s169, 8192, %s171, %s159, 256, 256, 16
        $region28: #{mlp_forward.1} parent=23 // pred_fallthru
          _
      $region24: #{mlp_forward.1} parent=5 // pred_fallthru
        _
      %p177 = scmp.le.s32.totalorder 1, %s16
      %p178 = scmp.lt.s32.totalorder %s16, 3
      %p179 = pnand %p177, %p178
      %p180 = pneg %p179
      // Predicated region
      $region29: #{mlp_forward.1} parent=5 // pred_check
        _
      $region30: #{mlp_forward.1} parent=5 // pred_check_branch
        %182 = sbr.rel (%p179) target = $region32
      $region31: #{mlp_forward.1} parent=5 // pred_region
        %s183 = ssub.s32 %s16, 1
        %s184 = sand.u32 %s29, 1
        %s185 = scalar_lea.sflag [#allocation3], %s184
        %s186 = sand.u32 %s29, 1
        %s187 = smul.addr %s186, 512
        %s188 = scalar_lea.vmem [#allocation2], %s187
        // Predicated region
        $region33: #{mlp_forward.1} parent=31 // pred_check
          %p189 = pneg %p42
        $region34: #{mlp_forward.1} parent=31 // pred_check_branch
          %191 = sbr.rel (%p189) target = $region36
        $region35: #{mlp_forward.1} parent=31 // pred_region
          %192 = dma.done %s185, 8192
        $region36: #{mlp_forward.1} parent=31 // pred_fallthru
          _
        // Predicated region
        $region37: #{mlp_forward.1} parent=31 // pred_check
          %p193 = pneg %p63
        $region38: #{mlp_forward.1} parent=31 // pred_check_branch
          %195 = sbr.rel (%p193) target = $region40
        $region39: #{mlp_forward.1} parent=31 // pred_region
          %196 = dma.done [#allocation6], 8192
        $region40: #{mlp_forward.1} parent=31 // pred_fallthru
          _
        // Predicated region
        $region41: #{mlp_forward.1} parent=31 // pred_check
          %p197 = pneg %p84
        $region42: #{mlp_forward.1} parent=31 // pred_check_branch
          %199 = sbr.rel (%p197) target = $region44
        $region43: #{mlp_forward.1} parent=31 // pred_region
          %200 = dma.done [#allocation6], 8192
        $region44: #{mlp_forward.1} parent=31 // pred_fallthru
          _
        %s201 = sand.u32 %s29, 1
        %s202 = scalar_lea.sflag [#allocation3], %s201
        %s203 = sand.u32 %s29, 1
        %s204 = smul.addr %s203, 512
        %s205 = scalar_lea.vmem [#allocation2], %s204
        %p206 = pneg %p42
        %p207 = pneg %p39
        %p208 = pneg %p63
        %p209 = pneg %p60
        %p210 = pneg %p84
        %p211 = pneg %p81
        %p212 = pneg %p110
        %p213 = pneg %p107
        %s214 = sand.u32 %s97, 1
        %s215 = scalar_lea.sflag [#allocation4], %s214
        %s216 = sand.u32 %s97, 1
        %s217 = smul.addr %s216, 512
        %s218 = scalar_lea.vmem [#allocation8], %s217
        %s219 = smul.u32 32, %s21
        %s220 = smul.u32 32, %s21
        %v221 = vld [vmem:[%s188] sm:$0xff]
        %v222 = vld [vmem:[%s188 + $0x8] sm:$0xff]
        %v223 = vld [vmem:[%s188 + $0x10] sm:$0xff]
        %v224 = vld [vmem:[%s188 + $0x18] sm:$0xff]
        %v225 = vld [vmem:[%s188 + $0x20] sm:$0xff]
        %v226 = vld [vmem:[%s188 + $0x28] sm:$0xff]
        %v227 = vld [vmem:[%s188 + $0x30] sm:$0xff]
        %v228 = vld [vmem:[%s188 + $0x38] sm:$0xff]
        %v229 = vld [vmem:[%s188 + $0x40] sm:$0xff]
        %v230 = vld [vmem:[%s188 + $0x48] sm:$0xff]
        %v231 = vld [vmem:[%s188 + $0x50] sm:$0xff]
        %v232 = vld [vmem:[%s188 + $0x58] sm:$0xff]
        %v233 = vld [vmem:[%s188 + $0x60] sm:$0xff]
        %v234 = vld [vmem:[%s188 + $0x68] sm:$0xff]
        %v235 = vld [vmem:[%s188 + $0x70] sm:$0xff]
        %v236 = vld [vmem:[%s188 + $0x78] sm:$0xff]
        %v237 = vld [vmem:[%s188 + $0x80] sm:$0xff]
        %v238 = vld [vmem:[%s188 + $0x88] sm:$0xff]
        %v239 = vld [vmem:[%s188 + $0x90] sm:$0xff]
        %v240 = vld [vmem:[%s188 + $0x98] sm:$0xff]
        %v241 = vld [vmem:[%s188 + $0xa0] sm:$0xff]
        %v242 = vld [vmem:[%s188 + $0xa8] sm:$0xff]
        %v243 = vld [vmem:[%s188 + $0xb0] sm:$0xff]
        %v244 = vld [vmem:[%s188 + $0xb8] sm:$0xff]
        %v245 = vld [vmem:[%s188 + $0xc0] sm:$0xff]
        %v246 = vld [vmem:[%s188 + $0xc8] sm:$0xff]
        %v247 = vld [vmem:[%s188 + $0xd0] sm:$0xff]
        %v248 = vld [vmem:[%s188 + $0xd8] sm:$0xff]
        %v249 = vld [vmem:[%s188 + $0xe0] sm:$0xff]
        %v250 = vld [vmem:[%s188 + $0xe8] sm:$0xff]
        %v251 = vld [vmem:[%s188 + $0xf0] sm:$0xff]
        %v252 = vld [vmem:[%s188 + $0xf8] sm:$0xff]
        %v253 = vld [vmem:[%s188 + $0x100] sm:$0xff]
        %v254 = vld [vmem:[%s188 + $0x108] sm:$0xff]
        %v255 = vld [vmem:[%s188 + $0x110] sm:$0xff]
        %v256 = vld [vmem:[%s188 + $0x118] sm:$0xff]
        %v257 = vld [vmem:[%s188 + $0x120] sm:$0xff]
        %v258 = vld [vmem:[%s188 + $0x128] sm:$0xff]
        %v259 = vld [vmem:[%s188 + $0x130] sm:$0xff]
        %v260 = vld [vmem:[%s188 + $0x138] sm:$0xff]
        %v261 = vld [vmem:[%s188 + $0x140] sm:$0xff]
        %v262 = vld [vmem:[%s188 + $0x148] sm:$0xff]
        %v263 = vld [vmem:[%s188 + $0x150] sm:$0xff]
        %v264 = vld [vmem:[%s188 + $0x158] sm:$0xff]
        %v265 = vld [vmem:[%s188 + $0x160] sm:$0xff]
        %v266 = vld [vmem:[%s188 + $0x168] sm:$0xff]
        %v267 = vld [vmem:[%s188 + $0x170] sm:$0xff]
        %v268 = vld [vmem:[%s188 + $0x178] sm:$0xff]
        %v269 = vld [vmem:[%s188 + $0x180] sm:$0xff]
        %v270 = vld [vmem:[%s188 + $0x188] sm:$0xff]
        %v271 = vld [vmem:[%s188 + $0x190] sm:$0xff]
        %v272 = vld [vmem:[%s188 + $0x198] sm:$0xff]
        %v273 = vld [vmem:[%s188 + $0x1a0] sm:$0xff]
        %v274 = vld [vmem:[%s188 + $0x1a8] sm:$0xff]
        %v275 = vld [vmem:[%s188 + $0x1b0] sm:$0xff]
        %v276 = vld [vmem:[%s188 + $0x1b8] sm:$0xff]
        %v277 = vld [vmem:[%s188 + $0x1c0] sm:$0xff]
        %v278 = vld [vmem:[%s188 + $0x1c8] sm:$0xff]
        %v279 = vld [vmem:[%s188 + $0x1d0] sm:$0xff]
        %v280 = vld [vmem:[%s188 + $0x1d8] sm:$0xff]
        %v281 = vld [vmem:[%s188 + $0x1e0] sm:$0xff]
        %v282 = vld [vmem:[%s188 + $0x1e8] sm:$0xff]
        %v283 = vld [vmem:[%s188 + $0x1f0] sm:$0xff]
        %v284 = vld [vmem:[%s188 + $0x1f8] sm:$0xff]
        %v285 = vpack.c.bf16 %v223, %v221
        %v286 = vpack.c.bf16 %v224, %v222
        %v287 = vpack.c.bf16 %v227, %v225
        %v288 = vpack.c.bf16 %v228, %v226
        %v289 = vpack.c.bf16 %v231, %v229
        %v290 = vpack.c.bf16 %v232, %v230
        %v291 = vpack.c.bf16 %v235, %v233
        %v292 = vpack.c.bf16 %v236, %v234
        %v293 = vpack.c.bf16 %v239, %v237
        %v294 = vpack.c.bf16 %v240, %v238
        %v295 = vpack.c.bf16 %v243, %v241
        %v296 = vpack.c.bf16 %v244, %v242
        %v297 = vpack.c.bf16 %v247, %v245
        %v298 = vpack.c.bf16 %v248, %v246
        %v299 = vpack.c.bf16 %v251, %v249
        %v300 = vpack.c.bf16 %v252, %v250
        %v301 = vpack.c.bf16 %v255, %v253
        %v302 = vpack.c.bf16 %v256, %v254
        %v303 = vpack.c.bf16 %v259, %v257
        %v304 = vpack.c.bf16 %v260, %v258
        %v305 = vpack.c.bf16 %v263, %v261
        %v306 = vpack.c.bf16 %v264, %v262
        %v307 = vpack.c.bf16 %v267, %v265
        %v308 = vpack.c.bf16 %v268, %v266
        %v309 = vpack.c.bf16 %v271, %v269
        %v310 = vpack.c.bf16 %v272, %v270
        %v311 = vpack.c.bf16 %v275, %v273
        %v312 = vpack.c.bf16 %v276, %v274
        %v313 = vpack.c.bf16 %v279, %v277
        %v314 = vpack.c.bf16 %v280, %v278
        %v315 = vpack.c.bf16 %v283, %v281
        %v316 = vpack.c.bf16 %v284, %v282
        %v317 = vld [vmem:[#allocation5] sm:$0xff]
        %v318 = vld [vmem:[#allocation5 + $0x8] sm:$0xff]
        %v319 = vld [vmem:[#allocation5 + $0x10] sm:$0xff]
        %v320 = vld [vmem:[#allocation5 + $0x18] sm:$0xff]
        %v321 = vld [vmem:[#allocation5 + $0x20] sm:$0xff]
        %v322 = vld [vmem:[#allocation5 + $0x28] sm:$0xff]
        %v323 = vld [vmem:[#allocation5 + $0x30] sm:$0xff]
        %v324 = vld [vmem:[#allocation5 + $0x38] sm:$0xff]
        %v325 = vld [vmem:[#allocation5 + $0x40] sm:$0xff]
        %v326 = vld [vmem:[#allocation5 + $0x48] sm:$0xff]
        %v327 = vld [vmem:[#allocation5 + $0x50] sm:$0xff]
        %v328 = vld [vmem:[#allocation5 + $0x58] sm:$0xff]
        %v329 = vld [vmem:[#allocation5 + $0x60] sm:$0xff]
        %v330 = vld [vmem:[#allocation5 + $0x68] sm:$0xff]
        %v331 = vld [vmem:[#allocation5 + $0x70] sm:$0xff]
        %v332 = vld [vmem:[#allocation5 + $0x78] sm:$0xff]
        %v333 = vld [vmem:[#allocation5 + $0x80] sm:$0xff]
        %v334 = vld [vmem:[#allocation5 + $0x88] sm:$0xff]
        %v335 = vld [vmem:[#allocation5 + $0x90] sm:$0xff]
        %v336 = vld [vmem:[#allocation5 + $0x98] sm:$0xff]
        %v337 = vld [vmem:[#allocation5 + $0xa0] sm:$0xff]
        %v338 = vld [vmem:[#allocation5 + $0xa8] sm:$0xff]
        %v339 = vld [vmem:[#allocation5 + $0xb0] sm:$0xff]
        %v340 = vld [vmem:[#allocation5 + $0xb8] sm:$0xff]
        %v341 = vld [vmem:[#allocation5 + $0xc0] sm:$0xff]
        %v342 = vld [vmem:[#allocation5 + $0xc8] sm:$0xff]
        %v343 = vld [vmem:[#allocation5 + $0xd0] sm:$0xff]
        %v344 = vld [vmem:[#allocation5 + $0xd8] sm:$0xff]
        %v345 = vld [vmem:[#allocation5 + $0xe0] sm:$0xff]
        %v346 = vld [vmem:[#allocation5 + $0xe8] sm:$0xff]
        %v347 = vld [vmem:[#allocation5 + $0xf0] sm:$0xff]
        %v348 = vld [vmem:[#allocation5 + $0xf8] sm:$0xff]
        %v349 = vld [vmem:[#allocation5 + $0x100] sm:$0xff]
        %v350 = vld [vmem:[#allocation5 + $0x108] sm:$0xff]
        %v351 = vld [vmem:[#allocation5 + $0x110] sm:$0xff]
        %v352 = vld [vmem:[#allocation5 + $0x118] sm:$0xff]
        %v353 = vld [vmem:[#allocation5 + $0x120] sm:$0xff]
        %v354 = vld [vmem:[#allocation5 + $0x128] sm:$0xff]
        %v355 = vld [vmem:[#allocation5 + $0x130] sm:$0xff]
        %v356 = vld [vmem:[#allocation5 + $0x138] sm:$0xff]
        %v357 = vld [vmem:[#allocation5 + $0x140] sm:$0xff]
        %v358 = vld [vmem:[#allocation5 + $0x148] sm:$0xff]
        %v359 = vld [vmem:[#allocation5 + $0x150] sm:$0xff]
        %v360 = vld [vmem:[#allocation5 + $0x158] sm:$0xff]
        %v361 = vld [vmem:[#allocation5 + $0x160] sm:$0xff]
        %v362 = vld [vmem:[#allocation5 + $0x168] sm:$0xff]
        %v363 = vld [vmem:[#allocation5 + $0x170] sm:$0xff]
        %v364 = vld [vmem:[#allocation5 + $0x178] sm:$0xff]
        %v365 = vld [vmem:[#allocation5 + $0x180] sm:$0xff]
        %v366 = vld [vmem:[#allocation5 + $0x188] sm:$0xff]
        %v367 = vld [vmem:[#allocation5 + $0x190] sm:$0xff]
        %v368 = vld [vmem:[#allocation5 + $0x198] sm:$0xff]
        %v369 = vld [vmem:[#allocation5 + $0x1a0] sm:$0xff]
        %v370 = vld [vmem:[#allocation5 + $0x1a8] sm:$0xff]
        %v371 = vld [vmem:[#allocation5 + $0x1b0] sm:$0xff]
        %v372 = vld [vmem:[#allocation5 + $0x1b8] sm:$0xff]
        %v373 = vld [vmem:[#allocation5 + $0x1c0] sm:$0xff]
        %v374 = vld [vmem:[#allocation5 + $0x1c8] sm:$0xff]
        %v375 = vld [vmem:[#allocation5 + $0x1d0] sm:$0xff]
        %v376 = vld [vmem:[#allocation5 + $0x1d8] sm:$0xff]
        %v377 = vld [vmem:[#allocation5 + $0x1e0] sm:$0xff]
        %v378 = vld [vmem:[#allocation5 + $0x1e8] sm:$0xff]
        %v379 = vld [vmem:[#allocation5 + $0x1f0] sm:$0xff]
        %v380 = vld [vmem:[#allocation5 + $0x1f8] sm:$0xff]
        %v445 = vunpack.c.l.b16 %v317
        %v446 = vunpack.c.h.b16 %v317
        %v447 = vunpack.c.l.b16 %v318
        %v448 = vunpack.c.h.b16 %v318
        %v449 = vunpack.c.l.b16 %v319
        %v450 = vunpack.c.h.b16 %v319
        %v451 = vunpack.c.l.b16 %v320
        %v452 = vunpack.c.h.b16 %v320
        %v453 = vunpack.c.l.b16 %v321
        %v454 = vunpack.c.h.b16 %v321
        %v455 = vunpack.c.l.b16 %v322
        %v456 = vunpack.c.h.b16 %v322
        %v457 = vunpack.c.l.b16 %v323
        %v458 = vunpack.c.h.b16 %v323
        %v459 = vunpack.c.l.b16 %v324
        %v460 = vunpack.c.h.b16 %v324
        %v461 = vunpack.c.l.b16 %v325
        %v462 = vunpack.c.h.b16 %v325
        %v463 = vunpack.c.l.b16 %v326
        %v464 = vunpack.c.h.b16 %v326
        %v465 = vunpack.c.l.b16 %v327
        %v466 = vunpack.c.h.b16 %v327
        %v467 = vunpack.c.l.b16 %v328
        %v468 = vunpack.c.h.b16 %v328
        %v469 = vunpack.c.l.b16 %v329
        %v470 = vunpack.c.h.b16 %v329
        %v471 = vunpack.c.l.b16 %v330
        %v472 = vunpack.c.h.b16 %v330
        %v473 = vunpack.c.l.b16 %v331
        %v474 = vunpack.c.h.b16 %v331
        %v475 = vunpack.c.l.b16 %v332
        %v476 = vunpack.c.h.b16 %v332
        %v477 = vunpack.c.l.b16 %v333
        %v478 = vunpack.c.h.b16 %v333
        %v479 = vunpack.c.l.b16 %v334
        %v480 = vunpack.c.h.b16 %v334
        %v481 = vunpack.c.l.b16 %v335
        %v482 = vunpack.c.h.b16 %v335
        %v483 = vunpack.c.l.b16 %v336
        %v484 = vunpack.c.h.b16 %v336
        %v485 = vunpack.c.l.b16 %v337
        %v486 = vunpack.c.h.b16 %v337
        %v487 = vunpack.c.l.b16 %v338
        %v488 = vunpack.c.h.b16 %v338
        %v489 = vunpack.c.l.b16 %v339
        %v490 = vunpack.c.h.b16 %v339
        %v491 = vunpack.c.l.b16 %v340
        %v492 = vunpack.c.h.b16 %v340
        %v493 = vunpack.c.l.b16 %v341
        %v494 = vunpack.c.h.b16 %v341
        %v495 = vunpack.c.l.b16 %v342
        %v496 = vunpack.c.h.b16 %v342
        %v497 = vunpack.c.l.b16 %v343
        %v498 = vunpack.c.h.b16 %v343
        %v499 = vunpack.c.l.b16 %v344
        %v500 = vunpack.c.h.b16 %v344
        %v501 = vunpack.c.l.b16 %v345
        %v502 = vunpack.c.h.b16 %v345
        %v503 = vunpack.c.l.b16 %v346
        %v504 = vunpack.c.h.b16 %v346
        %v505 = vunpack.c.l.b16 %v347
        %v506 = vunpack.c.h.b16 %v347
        %v507 = vunpack.c.l.b16 %v348
        %v508 = vunpack.c.h.b16 %v348
        %v509 = vunpack.c.l.b16 %v349
        %v510 = vunpack.c.h.b16 %v349
        %v511 = vunpack.c.l.b16 %v350
        %v512 = vunpack.c.h.b16 %v350
        %v513 = vunpack.c.l.b16 %v351
        %v514 = vunpack.c.h.b16 %v351
        %v515 = vunpack.c.l.b16 %v352
        %v516 = vunpack.c.h.b16 %v352
        %v517 = vunpack.c.l.b16 %v353
        %v518 = vunpack.c.h.b16 %v353
        %v519 = vunpack.c.l.b16 %v354
        %v520 = vunpack.c.h.b16 %v354
        %v521 = vunpack.c.l.b16 %v355
        %v522 = vunpack.c.h.b16 %v355
        %v523 = vunpack.c.l.b16 %v356
        %v524 = vunpack.c.h.b16 %v356
        %v525 = vunpack.c.l.b16 %v357
        %v526 = vunpack.c.h.b16 %v357
        %v527 = vunpack.c.l.b16 %v358
        %v528 = vunpack.c.h.b16 %v358
        %v529 = vunpack.c.l.b16 %v359
        %v530 = vunpack.c.h.b16 %v359
        %v531 = vunpack.c.l.b16 %v360
        %v532 = vunpack.c.h.b16 %v360
        %v533 = vunpack.c.l.b16 %v361
        %v534 = vunpack.c.h.b16 %v361
        %v535 = vunpack.c.l.b16 %v362
        %v536 = vunpack.c.h.b16 %v362
        %v537 = vunpack.c.l.b16 %v363
        %v538 = vunpack.c.h.b16 %v363
        %v539 = vunpack.c.l.b16 %v364
        %v540 = vunpack.c.h.b16 %v364
        %v541 = vunpack.c.l.b16 %v365
        %v542 = vunpack.c.h.b16 %v365
        %v543 = vunpack.c.l.b16 %v366
        %v544 = vunpack.c.h.b16 %v366
        %v545 = vunpack.c.l.b16 %v367
        %v546 = vunpack.c.h.b16 %v367
        %v547 = vunpack.c.l.b16 %v368
        %v548 = vunpack.c.h.b16 %v368
        %v549 = vunpack.c.l.b16 %v369
        %v550 = vunpack.c.h.b16 %v369
        %v551 = vunpack.c.l.b16 %v370
        %v552 = vunpack.c.h.b16 %v370
        %v553 = vunpack.c.l.b16 %v371
        %v554 = vunpack.c.h.b16 %v371
        %v555 = vunpack.c.l.b16 %v372
        %v556 = vunpack.c.h.b16 %v372
        %v557 = vunpack.c.l.b16 %v373
        %v558 = vunpack.c.h.b16 %v373
        %v559 = vunpack.c.l.b16 %v374
        %v560 = vunpack.c.h.b16 %v374
        %v561 = vunpack.c.l.b16 %v375
        %v562 = vunpack.c.h.b16 %v375
        %v563 = vunpack.c.l.b16 %v376
        %v564 = vunpack.c.h.b16 %v376
        %v565 = vunpack.c.l.b16 %v377
        %v566 = vunpack.c.h.b16 %v377
        %v567 = vunpack.c.l.b16 %v378
        %v568 = vunpack.c.h.b16 %v378
        %v569 = vunpack.c.l.b16 %v379
        %v570 = vunpack.c.h.b16 %v379
        %v571 = vunpack.c.l.b16 %v380
        %v572 = vunpack.c.h.b16 %v380
        %v573 = vpack.c.b16 %v449, %v445
        %v574 = vpack.c.b16 %v450, %v446
        %v575 = vpack.c.b16 %v451, %v447
        %v576 = vpack.c.b16 %v452, %v448
        %v577 = vpack.c.b16 %v457, %v453
        %v578 = vpack.c.b16 %v458, %v454
        %v579 = vpack.c.b16 %v459, %v455
        %v580 = vpack.c.b16 %v460, %v456
        %v581 = vpack.c.b16 %v465, %v461
        %v582 = vpack.c.b16 %v466, %v462
        %v583 = vpack.c.b16 %v467, %v463
        %v584 = vpack.c.b16 %v468, %v464
        %v585 = vpack.c.b16 %v473, %v469
        %v586 = vpack.c.b16 %v474, %v470
        %v587 = vpack.c.b16 %v475, %v471
        %v588 = vpack.c.b16 %v476, %v472
        %v589 = vpack.c.b16 %v481, %v477
        %v590 = vpack.c.b16 %v482, %v478
        %v591 = vpack.c.b16 %v483, %v479
        %v592 = vpack.c.b16 %v484, %v480
        %v593 = vpack.c.b16 %v489, %v485
        %v594 = vpack.c.b16 %v490, %v486
        %v595 = vpack.c.b16 %v491, %v487
        %v596 = vpack.c.b16 %v492, %v488
        %v597 = vpack.c.b16 %v497, %v493
        %v598 = vpack.c.b16 %v498, %v494
        %v599 = vpack.c.b16 %v499, %v495
        %v600 = vpack.c.b16 %v500, %v496
        %v601 = vpack.c.b16 %v505, %v501
        %v602 = vpack.c.b16 %v506, %v502
        %v603 = vpack.c.b16 %v507, %v503
        %v604 = vpack.c.b16 %v508, %v504
        %v605 = vpack.c.b16 %v513, %v509
        %v606 = vpack.c.b16 %v514, %v510
        %v607 = vpack.c.b16 %v515, %v511
        %v608 = vpack.c.b16 %v516, %v512
        %v609 = vpack.c.b16 %v521, %v517
        %v610 = vpack.c.b16 %v522, %v518
        %v611 = vpack.c.b16 %v523, %v519
        %v612 = vpack.c.b16 %v524, %v520
        %v613 = vpack.c.b16 %v529, %v525
        %v614 = vpack.c.b16 %v530, %v526
        %v615 = vpack.c.b16 %v531, %v527
        %v616 = vpack.c.b16 %v532, %v528
        %v617 = vpack.c.b16 %v537, %v533
        %v618 = vpack.c.b16 %v538, %v534
        %v619 = vpack.c.b16 %v539, %v535
        %v620 = vpack.c.b16 %v540, %v536
        %v621 = vpack.c.b16 %v545, %v541
        %v622 = vpack.c.b16 %v546, %v542
        %v623 = vpack.c.b16 %v547, %v543
        %v624 = vpack.c.b16 %v548, %v544
        %v625 = vpack.c.b16 %v553, %v549
        %v626 = vpack.c.b16 %v554, %v550
        %v627 = vpack.c.b16 %v555, %v551
        %v628 = vpack.c.b16 %v556, %v552
        %v629 = vpack.c.b16 %v561, %v557
        %v630 = vpack.c.b16 %v562, %v558
        %v631 = vpack.c.b16 %v563, %v559
        %v632 = vpack.c.b16 %v564, %v560
        %v633 = vpack.c.b16 %v569, %v565
        %v634 = vpack.c.b16 %v570, %v566
        %v635 = vpack.c.b16 %v571, %v567
        %v636 = vpack.c.b16 %v572, %v568
        %701 = vmatprep.subr.bf16.mxu0 %v574
        %702 = vmatpush1.bf16.msra.mxu0 %v573
        %703 = vmatprep.subr.bf16.mxu0 %v578
        %704 = vmatpush1.bf16.msra.mxu0 %v577
        %705 = vmatprep.subr.bf16.mxu0 %v582
        %706 = vmatpush1.bf16.msra.mxu0 %v581
        %707 = vmatprep.subr.bf16.mxu0 %v586
        %708 = vmatpush1.bf16.msra.mxu0 %v585
        %709 = vmatprep.subr.bf16.mxu0 %v590
        %710 = vmatpush1.bf16.msra.mxu0 %v589
        %711 = vmatprep.subr.bf16.mxu0 %v594
        %712 = vmatpush1.bf16.msra.mxu0 %v593
        %713 = vmatprep.subr.bf16.mxu0 %v598
        %714 = vmatpush1.bf16.msra.mxu0 %v597
        %715 = vmatprep.subr.bf16.mxu0 %v602
        %716 = vmatpush1.bf16.msra.mxu0 %v601
        %717 = vmatprep.subr.bf16.mxu0 %v606
        %718 = vmatpush1.bf16.msra.mxu0 %v605
        %719 = vmatprep.subr.bf16.mxu0 %v610
        %720 = vmatpush1.bf16.msra.mxu0 %v609
        %721 = vmatprep.subr.bf16.mxu0 %v614
        %722 = vmatpush1.bf16.msra.mxu0 %v613
        %723 = vmatprep.subr.bf16.mxu0 %v618
        %724 = vmatpush1.bf16.msra.mxu0 %v617
        %725 = vmatprep.subr.bf16.mxu0 %v622
        %726 = vmatpush1.bf16.msra.mxu0 %v621
        %727 = vmatprep.subr.bf16.mxu0 %v626
        %728 = vmatpush1.bf16.msra.mxu0 %v625
        %729 = vmatprep.subr.bf16.mxu0 %v630
        %730 = vmatpush1.bf16.msra.mxu0 %v629
        %731 = vmatprep.subr.bf16.mxu0 %v634
        %732 = vmatpush1.bf16.msra.mxu0 %v633
        %733 = vmatprep.mubr.bf16.mxu0 %v286
        %734 = vmatmul.mubr.bf16.gmra.mrb[0].mxu0 %v285
        %v735 = vpop.f32.mrb[0].mxu0
        %v736 = vadd.f32 0.0, %v735
        %v737 = vpop.f32.mrb[0].mxu0
        %v738 = vadd.f32 0.0, %v737
        %v739 = vpop.f32.mrb[0].mxu0
        %v740 = vadd.f32 0.0, %v739
        %v741 = vpop.f32.mrb[0].mxu0
        %v742 = vadd.f32 0.0, %v741
        %743 = vmatprep.mubr.bf16.mxu0 %v288
        %744 = vmatmul.mubr.bf16.gmra.mrb[0].mxu0 %v287
        %v745 = vpop.f32.mrb[0].mxu0
        %v746 = vadd.f32 0.0, %v745
        %v747 = vpop.f32.mrb[0].mxu0
        %v748 = vadd.f32 0.0, %v747
        %v749 = vpop.f32.mrb[0].mxu0
        %v750 = vadd.f32 0.0, %v749
        %v751 = vpop.f32.mrb[0].mxu0
        %v752 = vadd.f32 0.0, %v751
        %753 = vmatprep.mubr.bf16.mxu0 %v290
        %754 = vmatmul.mubr.bf16.gmra.mrb[0].mxu0 %v289
        %v755 = vpop.f32.mrb[0].mxu0
        %v756 = vadd.f32 0.0, %v755
        %v757 = vpop.f32.mrb[0].mxu0
        %v758 = vadd.f32 0.0, %v757
        %v759 = vpop.f32.mrb[0].mxu0
        %v760 = vadd.f32 0.0, %v759
        %v761 = vpop.f32.mrb[0].mxu0
        %v762 = vadd.f32 0.0, %v761
        %763 = vmatprep.mubr.bf16.mxu0 %v292
        %764 = vmatmul.mubr.bf16.gmra.mrb[0].mxu0 %v291
        %v765 = vpop.f32.mrb[0].mxu0
        %v766 = vadd.f32 0.0, %v765
        %v767 = vpop.f32.mrb[0].mxu0
        %v768 = vadd.f32 0.0, %v767
        %v769 = vpop.f32.mrb[0].mxu0
        %v770 = vadd.f32 0.0, %v769
        %v771 = vpop.f32.mrb[0].mxu0
        %v772 = vadd.f32 0.0, %v771
        %773 = vmatprep.mubr.bf16.mxu0 %v294
        %774 = vmatmul.mubr.bf16.gmra.mrb[0].mxu0 %v293
        %v775 = vpop.f32.mrb[0].mxu0
        %v776 = vadd.f32 0.0, %v775
        %v777 = vpop.f32.mrb[0].mxu0
        %v778 = vadd.f32 0.0, %v777
        %v779 = vpop.f32.mrb[0].mxu0
        %v780 = vadd.f32 0.0, %v779
        %v781 = vpop.f32.mrb[0].mxu0
        %v782 = vadd.f32 0.0, %v781
        %783 = vmatprep.mubr.bf16.mxu0 %v296
        %784 = vmatmul.mubr.bf16.gmra.mrb[0].mxu0 %v295
        %v785 = vpop.f32.mrb[0].mxu0
        %v786 = vadd.f32 0.0, %v785
        %v787 = vpop.f32.mrb[0].mxu0
        %v788 = vadd.f32 0.0, %v787
        %v789 = vpop.f32.mrb[0].mxu0
        %v790 = vadd.f32 0.0, %v789
        %v791 = vpop.f32.mrb[0].mxu0
        %v792 = vadd.f32 0.0, %v791
        %793 = vmatprep.mubr.bf16.mxu0 %v298
        %794 = vmatmul.mubr.bf16.gmra.mrb[0].mxu0 %v297
        %v795 = vpop.f32.mrb[0].mxu0
        %v796 = vadd.f32 0.0, %v795
        %v797 = vpop.f32.mrb[0].mxu0
        %v798 = vadd.f32 0.0, %v797
        %v799 = vpop.f32.mrb[0].mxu0
        %v800 = vadd.f32 0.0, %v799
        %v801 = vpop.f32.mrb[0].mxu0
        %v802 = vadd.f32 0.0, %v801
        %803 = vmatprep.mubr.bf16.mxu0 %v300
        %804 = vmatmul.mubr.bf16.gmra.mrb[0].mxu0 %v299
        %v805 = vpop.f32.mrb[0].mxu0
        %v806 = vadd.f32 0.0, %v805
        %v807 = vpop.f32.mrb[0].mxu0
        %v808 = vadd.f32 0.0, %v807
        %v809 = vpop.f32.mrb[0].mxu0
        %v810 = vadd.f32 0.0, %v809
        %v811 = vpop.f32.mrb[0].mxu0
        %v812 = vadd.f32 0.0, %v811
        %813 = vmatprep.mubr.bf16.mxu0 %v302
        %814 = vmatmul.mubr.bf16.gmra.mrb[0].mxu0 %v301
        %v815 = vpop.f32.mrb[0].mxu0
        %v816 = vadd.f32 0.0, %v815
        %v817 = vpop.f32.mrb[0].mxu0
        %v818 = vadd.f32 0.0, %v817
        %v819 = vpop.f32.mrb[0].mxu0
        %v820 = vadd.f32 0.0, %v819
        %v821 = vpop.f32.mrb[0].mxu0
        %v822 = vadd.f32 0.0, %v821
        %823 = vmatprep.mubr.bf16.mxu0 %v304
        %824 = vmatmul.mubr.bf16.gmra.mrb[0].mxu0 %v303
        %v825 = vpop.f32.mrb[0].mxu0
        %v826 = vadd.f32 0.0, %v825
        %v827 = vpop.f32.mrb[0].mxu0
        %v828 = vadd.f32 0.0, %v827
        %v829 = vpop.f32.mrb[0].mxu0
        %v830 = vadd.f32 0.0, %v829
        %v831 = vpop.f32.mrb[0].mxu0
        %v832 = vadd.f32 0.0, %v831
        %833 = vmatprep.mubr.bf16.mxu0 %v306
        %834 = vmatmul.mubr.bf16.gmra.mrb[0].mxu0 %v305
        %v835 = vpop.f32.mrb[0].mxu0
        %v836 = vadd.f32 0.0, %v835
        %v837 = vpop.f32.mrb[0].mxu0
        %v838 = vadd.f32 0.0, %v837
        %v839 = vpop.f32.mrb[0].mxu0
        %v840 = vadd.f32 0.0, %v839
        %v841 = vpop.f32.mrb[0].mxu0
        %v842 = vadd.f32 0.0, %v841
        %843 = vmatprep.mubr.bf16.mxu0 %v308
        %844 = vmatmul.mubr.bf16.gmra.mrb[0].mxu0 %v307
        %v845 = vpop.f32.mrb[0].mxu0
        %v846 = vadd.f32 0.0, %v845
        %v847 = vpop.f32.mrb[0].mxu0
        %v848 = vadd.f32 0.0, %v847
        %v849 = vpop.f32.mrb[0].mxu0
        %v850 = vadd.f32 0.0, %v849
        %v851 = vpop.f32.mrb[0].mxu0
        %v852 = vadd.f32 0.0, %v851
        %853 = vmatprep.mubr.bf16.mxu0 %v310
        %854 = vmatmul.mubr.bf16.gmra.mrb[0].mxu0 %v309
        %v855 = vpop.f32.mrb[0].mxu0
        %v856 = vadd.f32 0.0, %v855
        %v857 = vpop.f32.mrb[0].mxu0
        %v858 = vadd.f32 0.0, %v857
        %v859 = vpop.f32.mrb[0].mxu0
        %v860 = vadd.f32 0.0, %v859
        %v861 = vpop.f32.mrb[0].mxu0
        %v862 = vadd.f32 0.0, %v861
        %863 = vmatprep.mubr.bf16.mxu0 %v312
        %864 = vmatmul.mubr.bf16.gmra.mrb[0].mxu0 %v311
        %v865 = vpop.f32.mrb[0].mxu0
        %v866 = vadd.f32 0.0, %v865
        %v867 = vpop.f32.mrb[0].mxu0
        %v868 = vadd.f32 0.0, %v867
        %v869 = vpop.f32.mrb[0].mxu0
        %v870 = vadd.f32 0.0, %v869
        %v871 = vpop.f32.mrb[0].mxu0
        %v872 = vadd.f32 0.0, %v871
        %873 = vmatprep.mubr.bf16.mxu0 %v314
        %874 = vmatmul.mubr.bf16.gmra.mrb[0].mxu0 %v313
        %v875 = vpop.f32.mrb[0].mxu0
        %v876 = vadd.f32 0.0, %v875
        %v877 = vpop.f32.mrb[0].mxu0
        %v878 = vadd.f32 0.0, %v877
        %v879 = vpop.f32.mrb[0].mxu0
        %v880 = vadd.f32 0.0, %v879
        %v881 = vpop.f32.mrb[0].mxu0
        %v882 = vadd.f32 0.0, %v881
        %883 = vmatprep.mubr.bf16.mxu0 %v316
        %884 = vmatmul.mubr.bf16.gmra.mrb[0].mxu0 %v315
        %v885 = vpop.f32.mrb[0].mxu0
        %v886 = vadd.f32 0.0, %v885
        %v887 = vpop.f32.mrb[0].mxu0
        %v888 = vadd.f32 0.0, %v887
        %v889 = vpop.f32.mrb[0].mxu0
        %v890 = vadd.f32 0.0, %v889
        %v891 = vpop.f32.mrb[0].mxu0
        %v892 = vadd.f32 0.0, %v891
        %893 = vdwg.mxu0
        %894 = vmatprep.subr.bf16.mxu0 %v576
        %895 = vmatpush1.bf16.msra.mxu0 %v575
        %896 = vmatprep.subr.bf16.mxu0 %v580
        %897 = vmatpush1.bf16.msra.mxu0 %v579
        %898 = vmatprep.subr.bf16.mxu0 %v584
        %899 = vmatpush1.bf16.msra.mxu0 %v583
        %900 = vmatprep.subr.bf16.mxu0 %v588
        %901 = vmatpush1.bf16.msra.mxu0 %v587
        %902 = vmatprep.subr.bf16.mxu0 %v592
        %903 = vmatpush1.bf16.msra.mxu0 %v591
        %904 = vmatprep.subr.bf16.mxu0 %v596
        %905 = vmatpush1.bf16.msra.mxu0 %v595
        %906 = vmatprep.subr.bf16.mxu0 %v600
        %907 = vmatpush1.bf16.msra.mxu0 %v599
        %908 = vmatprep.subr.bf16.mxu0 %v604
        %909 = vmatpush1.bf16.msra.mxu0 %v603
        %910 = vmatprep.subr.bf16.mxu0 %v608
        %911 = vmatpush1.bf16.msra.mxu0 %v607
        %912 = vmatprep.subr.bf16.mxu0 %v612
        %913 = vmatpush1.bf16.msra.mxu0 %v611
        %914 = vmatprep.subr.bf16.mxu0 %v616
        %915 = vmatpush1.bf16.msra.mxu0 %v615
        %916 = vmatprep.subr.bf16.mxu0 %v620
        %917 = vmatpush1.bf16.msra.mxu0 %v619
        %918 = vmatprep.subr.bf16.mxu0 %v624
        %919 = vmatpush1.bf16.msra.mxu0 %v623
        %920 = vmatprep.subr.bf16.mxu0 %v628
        %921 = vmatpush1.bf16.msra.mxu0 %v627
        %922 = vmatprep.subr.bf16.mxu0 %v632
        %923 = vmatpush1.bf16.msra.mxu0 %v631
        %924 = vmatprep.subr.bf16.mxu0 %v636
        %925 = vmatpush1.bf16.msra.mxu0 %v635
        %926 = vmatprep.mubr.bf16.mxu0 %v286
        %927 = vmatmul.mubr.bf16.gmra.mrb[0].mxu0 %v285
        %v928 = vpop.f32.mrb[0].mxu0
        %v929 = vadd.f32 0.0, %v928
        %v930 = vpop.f32.mrb[0].mxu0
        %v931 = vadd.f32 0.0, %v930
        %v932 = vpop.f32.mrb[0].mxu0
        %v933 = vadd.f32 0.0, %v932
        %v934 = vpop.f32.mrb[0].mxu0
        %v935 = vadd.f32 0.0, %v934
        %936 = vmatprep.mubr.bf16.mxu0 %v288
        %937 = vmatmul.mubr.bf16.gmra.mrb[0].mxu0 %v287
        %v938 = vpop.f32.mrb[0].mxu0
        %v939 = vadd.f32 0.0, %v938
        %v940 = vpop.f32.mrb[0].mxu0
        %v941 = vadd.f32 0.0, %v940
        %v942 = vpop.f32.mrb[0].mxu0
        %v943 = vadd.f32 0.0, %v942
        %v944 = vpop.f32.mrb[0].mxu0
        %v945 = vadd.f32 0.0, %v944
        %946 = vmatprep.mubr.bf16.mxu0 %v290
        %947 = vmatmul.mubr.bf16.gmra.mrb[0].mxu0 %v289
        %v948 = vpop.f32.mrb[0].mxu0
        %v949 = vadd.f32 0.0, %v948
        %v950 = vpop.f32.mrb[0].mxu0
        %v951 = vadd.f32 0.0, %v950
        %v952 = vpop.f32.mrb[0].mxu0
        %v953 = vadd.f32 0.0, %v952
        %v954 = vpop.f32.mrb[0].mxu0
        %v955 = vadd.f32 0.0, %v954
        %956 = vmatprep.mubr.bf16.mxu0 %v292
        %957 = vmatmul.mubr.bf16.gmra.mrb[0].mxu0 %v291
        %v958 = vpop.f32.mrb[0].mxu0
        %v959 = vadd.f32 0.0, %v958
        %v960 = vpop.f32.mrb[0].mxu0
        %v961 = vadd.f32 0.0, %v960
        %v962 = vpop.f32.mrb[0].mxu0
        %v963 = vadd.f32 0.0, %v962
        %v964 = vpop.f32.mrb[0].mxu0
        %v965 = vadd.f32 0.0, %v964
        %966 = vmatprep.mubr.bf16.mxu0 %v294
        %967 = vmatmul.mubr.bf16.gmra.mrb[0].mxu0 %v293
        %v968 = vpop.f32.mrb[0].mxu0
        %v969 = vadd.f32 0.0, %v968
        %v970 = vpop.f32.mrb[0].mxu0
        %v971 = vadd.f32 0.0, %v970
        %v972 = vpop.f32.mrb[0].mxu0
        %v973 = vadd.f32 0.0, %v972
        %v974 = vpop.f32.mrb[0].mxu0
        %v975 = vadd.f32 0.0, %v974
        %976 = vmatprep.mubr.bf16.mxu0 %v296
        %977 = vmatmul.mubr.bf16.gmra.mrb[0].mxu0 %v295
        %v978 = vpop.f32.mrb[0].mxu0
        %v979 = vadd.f32 0.0, %v978
        %v980 = vpop.f32.mrb[0].mxu0
        %v981 = vadd.f32 0.0, %v980
        %v982 = vpop.f32.mrb[0].mxu0
        %v983 = vadd.f32 0.0, %v982
        %v984 = vpop.f32.mrb[0].mxu0
        %v985 = vadd.f32 0.0, %v984
        %986 = vmatprep.mubr.bf16.mxu0 %v298
        %987 = vmatmul.mubr.bf16.gmra.mrb[0].mxu0 %v297
        %v988 = vpop.f32.mrb[0].mxu0
        %v989 = vadd.f32 0.0, %v988
        %v990 = vpop.f32.mrb[0].mxu0
        %v991 = vadd.f32 0.0, %v990
        %v992 = vpop.f32.mrb[0].mxu0
        %v993 = vadd.f32 0.0, %v992
        %v994 = vpop.f32.mrb[0].mxu0
        %v995 = vadd.f32 0.0, %v994
        %996 = vmatprep.mubr.bf16.mxu0 %v300
        %997 = vmatmul.mubr.bf16.gmra.mrb[0].mxu0 %v299
        %v998 = vpop.f32.mrb[0].mxu0
        %v999 = vadd.f32 0.0, %v998
        %v1000 = vpop.f32.mrb[0].mxu0
        %v1001 = vadd.f32 0.0, %v1000
        %v1002 = vpop.f32.mrb[0].mxu0
        %v1003 = vadd.f32 0.0, %v1002
        %v1004 = vpop.f32.mrb[0].mxu0
        %v1005 = vadd.f32 0.0, %v1004
        %1006 = vmatprep.mubr.bf16.mxu0 %v302
        %1007 = vmatmul.mubr.bf16.gmra.mrb[0].mxu0 %v301
        %v1008 = vpop.f32.mrb[0].mxu0
        %v1009 = vadd.f32 0.0, %v1008
        %v1010 = vpop.f32.mrb[0].mxu0
        %v1011 = vadd.f32 0.0, %v1010
        %v1012 = vpop.f32.mrb[0].mxu0
        %v1013 = vadd.f32 0.0, %v1012
        %v1014 = vpop.f32.mrb[0].mxu0
        %v1015 = vadd.f32 0.0, %v1014
        %1016 = vmatprep.mubr.bf16.mxu0 %v304
        %1017 = vmatmul.mubr.bf16.gmra.mrb[0].mxu0 %v303
        %v1018 = vpop.f32.mrb[0].mxu0
        %v1019 = vadd.f32 0.0, %v1018
        %v1020 = vpop.f32.mrb[0].mxu0
        %v1021 = vadd.f32 0.0, %v1020
        %v1022 = vpop.f32.mrb[0].mxu0
        %v1023 = vadd.f32 0.0, %v1022
        %v1024 = vpop.f32.mrb[0].mxu0
        %v1025 = vadd.f32 0.0, %v1024
        %1026 = vmatprep.mubr.bf16.mxu0 %v306
        %1027 = vmatmul.mubr.bf16.gmra.mrb[0].mxu0 %v305
        %v1028 = vpop.f32.mrb[0].mxu0
        %v1029 = vadd.f32 0.0, %v1028
        %v1030 = vpop.f32.mrb[0].mxu0
        %v1031 = vadd.f32 0.0, %v1030
        %v1032 = vpop.f32.mrb[0].mxu0
        %v1033 = vadd.f32 0.0, %v1032
        %v1034 = vpop.f32.mrb[0].mxu0
        %v1035 = vadd.f32 0.0, %v1034
        %1036 = vmatprep.mubr.bf16.mxu0 %v308
        %1037 = vmatmul.mubr.bf16.gmra.mrb[0].mxu0 %v307
        %v1038 = vpop.f32.mrb[0].mxu0
        %v1039 = vadd.f32 0.0, %v1038
        %v1040 = vpop.f32.mrb[0].mxu0
        %v1041 = vadd.f32 0.0, %v1040
        %v1042 = vpop.f32.mrb[0].mxu0
        %v1043 = vadd.f32 0.0, %v1042
        %v1044 = vpop.f32.mrb[0].mxu0
        %v1045 = vadd.f32 0.0, %v1044
        %1046 = vmatprep.mubr.bf16.mxu0 %v310
        %1047 = vmatmul.mubr.bf16.gmra.mrb[0].mxu0 %v309
        %v1048 = vpop.f32.mrb[0].mxu0
        %v1049 = vadd.f32 0.0, %v1048
        %v1050 = vpop.f32.mrb[0].mxu0
        %v1051 = vadd.f32 0.0, %v1050
        %v1052 = vpop.f32.mrb[0].mxu0
        %v1053 = vadd.f32 0.0, %v1052
        %v1054 = vpop.f32.mrb[0].mxu0
        %v1055 = vadd.f32 0.0, %v1054
        %1056 = vmatprep.mubr.bf16.mxu0 %v312
        %1057 = vmatmul.mubr.bf16.gmra.mrb[0].mxu0 %v311
        %v1058 = vpop.f32.mrb[0].mxu0
        %v1059 = vadd.f32 0.0, %v1058
        %v1060 = vpop.f32.mrb[0].mxu0
        %v1061 = vadd.f32 0.0, %v1060
        %v1062 = vpop.f32.mrb[0].mxu0
        %v1063 = vadd.f32 0.0, %v1062
        %v1064 = vpop.f32.mrb[0].mxu0
        %v1065 = vadd.f32 0.0, %v1064
        %1066 = vmatprep.mubr.bf16.mxu0 %v314
        %1067 = vmatmul.mubr.bf16.gmra.mrb[0].mxu0 %v313
        %v1068 = vpop.f32.mrb[0].mxu0
        %v1069 = vadd.f32 0.0, %v1068
        %v1070 = vpop.f32.mrb[0].mxu0
        %v1071 = vadd.f32 0.0, %v1070
        %v1072 = vpop.f32.mrb[0].mxu0
        %v1073 = vadd.f32 0.0, %v1072
        %v1074 = vpop.f32.mrb[0].mxu0
        %v1075 = vadd.f32 0.0, %v1074
        %1076 = vmatprep.mubr.bf16.mxu0 %v316
        %1077 = vmatmul.mubr.bf16.gmra.mrb[0].mxu0 %v315
        %v1078 = vpop.f32.mrb[0].mxu0
        %v1079 = vadd.f32 0.0, %v1078
        %v1080 = vpop.f32.mrb[0].mxu0
        %v1081 = vadd.f32 0.0, %v1080
        %v1082 = vpop.f32.mrb[0].mxu0
        %v1083 = vadd.f32 0.0, %v1082
        %v1084 = vpop.f32.mrb[0].mxu0
        %v1085 = vadd.f32 0.0, %v1084
        %1086 = vdwg.mxu0
        %v1087 = vmax.f32 %v736, 0.0
        %v1088 = vmax.f32 %v738, 0.0
        %v1089 = vmax.f32 %v929, 0.0
        %v1090 = vmax.f32 %v931, 0.0
        %v1091 = vmax.f32 %v740, 0.0
        %v1092 = vmax.f32 %v742, 0.0
        %v1093 = vmax.f32 %v933, 0.0
        %v1094 = vmax.f32 %v935, 0.0
        %v1095 = vmax.f32 %v746, 0.0
        %v1096 = vmax.f32 %v748, 0.0
        %v1097 = vmax.f32 %v939, 0.0
        %v1098 = vmax.f32 %v941, 0.0
        %v1099 = vmax.f32 %v750, 0.0
        %v1100 = vmax.f32 %v752, 0.0
        %v1101 = vmax.f32 %v943, 0.0
        %v1102 = vmax.f32 %v945, 0.0
        %v1103 = vmax.f32 %v756, 0.0
        %v1104 = vmax.f32 %v758, 0.0
        %v1105 = vmax.f32 %v949, 0.0
        %v1106 = vmax.f32 %v951, 0.0
        %v1107 = vmax.f32 %v760, 0.0
        %v1108 = vmax.f32 %v762, 0.0
        %v1109 = vmax.f32 %v953, 0.0
        %v1110 = vmax.f32 %v955, 0.0
        %v1111 = vmax.f32 %v766, 0.0
        %v1112 = vmax.f32 %v768, 0.0
        %v1113 = vmax.f32 %v959, 0.0
        %v1114 = vmax.f32 %v961, 0.0
        %v1115 = vmax.f32 %v770, 0.0
        %v1116 = vmax.f32 %v772, 0.0
        %v1117 = vmax.f32 %v963, 0.0
        %v1118 = vmax.f32 %v965, 0.0
        %v1119 = vmax.f32 %v776, 0.0
        %v1120 = vmax.f32 %v778, 0.0
        %v1121 = vmax.f32 %v969, 0.0
        %v1122 = vmax.f32 %v971, 0.0
        %v1123 = vmax.f32 %v780, 0.0
        %v1124 = vmax.f32 %v782, 0.0
        %v1125 = vmax.f32 %v973, 0.0
        %v1126 = vmax.f32 %v975, 0.0
        %v1127 = vmax.f32 %v786, 0.0
        %v1128 = vmax.f32 %v788, 0.0
        %v1129 = vmax.f32 %v979, 0.0
        %v1130 = vmax.f32 %v981, 0.0
        %v1131 = vmax.f32 %v790, 0.0
        %v1132 = vmax.f32 %v792, 0.0
        %v1133 = vmax.f32 %v983, 0.0
        %v1134 = vmax.f32 %v985, 0.0
        %v1135 = vmax.f32 %v796, 0.0
        %v1136 = vmax.f32 %v798, 0.0
        %v1137 = vmax.f32 %v989, 0.0
        %v1138 = vmax.f32 %v991, 0.0
        %v1139 = vmax.f32 %v800, 0.0
        %v1140 = vmax.f32 %v802, 0.0
        %v1141 = vmax.f32 %v993, 0.0
        %v1142 = vmax.f32 %v995, 0.0
        %v1143 = vmax.f32 %v806, 0.0
        %v1144 = vmax.f32 %v808, 0.0
        %v1145 = vmax.f32 %v999, 0.0
        %v1146 = vmax.f32 %v1001, 0.0
        %v1147 = vmax.f32 %v810, 0.0
        %v1148 = vmax.f32 %v812, 0.0
        %v1149 = vmax.f32 %v1003, 0.0
        %v1150 = vmax.f32 %v1005, 0.0
        %v1151 = vmax.f32 %v816, 0.0
        %v1152 = vmax.f32 %v818, 0.0
        %v1153 = vmax.f32 %v1009, 0.0
        %v1154 = vmax.f32 %v1011, 0.0
        %v1155 = vmax.f32 %v820, 0.0
        %v1156 = vmax.f32 %v822, 0.0
        %v1157 = vmax.f32 %v1013, 0.0
        %v1158 = vmax.f32 %v1015, 0.0
        %v1159 = vmax.f32 %v826, 0.0
        %v1160 = vmax.f32 %v828, 0.0
        %v1161 = vmax.f32 %v1019, 0.0
        %v1162 = vmax.f32 %v1021, 0.0
        %v1163 = vmax.f32 %v830, 0.0
        %v1164 = vmax.f32 %v832, 0.0
        %v1165 = vmax.f32 %v1023, 0.0
        %v1166 = vmax.f32 %v1025, 0.0
        %v1167 = vmax.f32 %v836, 0.0
        %v1168 = vmax.f32 %v838, 0.0
        %v1169 = vmax.f32 %v1029, 0.0
        %v1170 = vmax.f32 %v1031, 0.0
        %v1171 = vmax.f32 %v840, 0.0
        %v1172 = vmax.f32 %v842, 0.0
        %v1173 = vmax.f32 %v1033, 0.0
        %v1174 = vmax.f32 %v1035, 0.0
        %v1175 = vmax.f32 %v846, 0.0
        %v1176 = vmax.f32 %v848, 0.0
        %v1177 = vmax.f32 %v1039, 0.0
        %v1178 = vmax.f32 %v1041, 0.0
        %v1179 = vmax.f32 %v850, 0.0
        %v1180 = vmax.f32 %v852, 0.0
        %v1181 = vmax.f32 %v1043, 0.0
        %v1182 = vmax.f32 %v1045, 0.0
        %v1183 = vmax.f32 %v856, 0.0
        %v1184 = vmax.f32 %v858, 0.0
        %v1185 = vmax.f32 %v1049, 0.0
        %v1186 = vmax.f32 %v1051, 0.0
        %v1187 = vmax.f32 %v860, 0.0
        %v1188 = vmax.f32 %v862, 0.0
        %v1189 = vmax.f32 %v1053, 0.0
        %v1190 = vmax.f32 %v1055, 0.0
        %v1191 = vmax.f32 %v866, 0.0
        %v1192 = vmax.f32 %v868, 0.0
        %v1193 = vmax.f32 %v1059, 0.0
        %v1194 = vmax.f32 %v1061, 0.0
        %v1195 = vmax.f32 %v870, 0.0
        %v1196 = vmax.f32 %v872, 0.0
        %v1197 = vmax.f32 %v1063, 0.0
        %v1198 = vmax.f32 %v1065, 0.0
        %v1199 = vmax.f32 %v876, 0.0
        %v1200 = vmax.f32 %v878, 0.0
        %v1201 = vmax.f32 %v1069, 0.0
        %v1202 = vmax.f32 %v1071, 0.0
        %v1203 = vmax.f32 %v880, 0.0
        %v1204 = vmax.f32 %v882, 0.0
        %v1205 = vmax.f32 %v1073, 0.0
        %v1206 = vmax.f32 %v1075, 0.0
        %v1207 = vmax.f32 %v886, 0.0
        %v1208 = vmax.f32 %v888, 0.0
        %v1209 = vmax.f32 %v1079, 0.0
        %v1210 = vmax.f32 %v1081, 0.0
        %v1211 = vmax.f32 %v890, 0.0
        %v1212 = vmax.f32 %v892, 0.0
        %v1213 = vmax.f32 %v1083, 0.0
        %v1214 = vmax.f32 %v1085, 0.0
        %v1215 = vpack.c.bf16 %v1091, %v1087
        %v1216 = vpack.c.bf16 %v1092, %v1088
        %v1217 = vpack.c.bf16 %v1093, %v1089
        %v1218 = vpack.c.bf16 %v1094, %v1090
        %v1219 = vpack.c.bf16 %v1099, %v1095
        %v1220 = vpack.c.bf16 %v1100, %v1096
        %v1221 = vpack.c.bf16 %v1101, %v1097
        %v1222 = vpack.c.bf16 %v1102, %v1098
        %v1223 = vpack.c.bf16 %v1107, %v1103
        %v1224 = vpack.c.bf16 %v1108, %v1104
        %v1225 = vpack.c.bf16 %v1109, %v1105
        %v1226 = vpack.c.bf16 %v1110, %v1106
        %v1227 = vpack.c.bf16 %v1115, %v1111
        %v1228 = vpack.c.bf16 %v1116, %v1112
        %v1229 = vpack.c.bf16 %v1117, %v1113
        %v1230 = vpack.c.bf16 %v1118, %v1114
        %v1231 = vpack.c.bf16 %v1123, %v1119
        %v1232 = vpack.c.bf16 %v1124, %v1120
        %v1233 = vpack.c.bf16 %v1125, %v1121
        %v1234 = vpack.c.bf16 %v1126, %v1122
        %v1235 = vpack.c.bf16 %v1131, %v1127
        %v1236 = vpack.c.bf16 %v1132, %v1128
        %v1237 = vpack.c.bf16 %v1133, %v1129
        %v1238 = vpack.c.bf16 %v1134, %v1130
        %v1239 = vpack.c.bf16 %v1139, %v1135
        %v1240 = vpack.c.bf16 %v1140, %v1136
        %v1241 = vpack.c.bf16 %v1141, %v1137
        %v1242 = vpack.c.bf16 %v1142, %v1138
        %v1243 = vpack.c.bf16 %v1147, %v1143
        %v1244 = vpack.c.bf16 %v1148, %v1144
        %v1245 = vpack.c.bf16 %v1149, %v1145
        %v1246 = vpack.c.bf16 %v1150, %v1146
        %v1247 = vpack.c.bf16 %v1155, %v1151
        %v1248 = vpack.c.bf16 %v1156, %v1152
        %v1249 = vpack.c.bf16 %v1157, %v1153
        %v1250 = vpack.c.bf16 %v1158, %v1154
        %v1251 = vpack.c.bf16 %v1163, %v1159
        %v1252 = vpack.c.bf16 %v1164, %v1160
        %v1253 = vpack.c.bf16 %v1165, %v1161
        %v1254 = vpack.c.bf16 %v1166, %v1162
        %v1255 = vpack.c.bf16 %v1171, %v1167
        %v1256 = vpack.c.bf16 %v1172, %v1168
        %v1257 = vpack.c.bf16 %v1173, %v1169
        %v1258 = vpack.c.bf16 %v1174, %v1170
        %v1259 = vpack.c.bf16 %v1179, %v1175
        %v1260 = vpack.c.bf16 %v1180, %v1176
        %v1261 = vpack.c.bf16 %v1181, %v1177
        %v1262 = vpack.c.bf16 %v1182, %v1178
        %v1263 = vpack.c.bf16 %v1187, %v1183
        %v1264 = vpack.c.bf16 %v1188, %v1184
        %v1265 = vpack.c.bf16 %v1189, %v1185
        %v1266 = vpack.c.bf16 %v1190, %v1186
        %v1267 = vpack.c.bf16 %v1195, %v1191
        %v1268 = vpack.c.bf16 %v1196, %v1192
        %v1269 = vpack.c.bf16 %v1197, %v1193
        %v1270 = vpack.c.bf16 %v1198, %v1194
        %v1271 = vpack.c.bf16 %v1203, %v1199
        %v1272 = vpack.c.bf16 %v1204, %v1200
        %v1273 = vpack.c.bf16 %v1205, %v1201
        %v1274 = vpack.c.bf16 %v1206, %v1202
        %v1275 = vpack.c.bf16 %v1211, %v1207
        %v1276 = vpack.c.bf16 %v1212, %v1208
        %v1277 = vpack.c.bf16 %v1213, %v1209
        %v1278 = vpack.c.bf16 %v1214, %v1210
        %v1279 = vld [vmem:[#allocation7] sm:$0xff]
        %v1280 = vld [vmem:[#allocation7 + $0x8] sm:$0xff]
        %v1281 = vld [vmem:[#allocation7 + $0x10] sm:$0xff]
        %v1282 = vld [vmem:[#allocation7 + $0x18] sm:$0xff]
        %v1283 = vld [vmem:[#allocation7 + $0x20] sm:$0xff]
        %v1284 = vld [vmem:[#allocation7 + $0x28] sm:$0xff]
        %v1285 = vld [vmem:[#allocation7 + $0x30] sm:$0xff]
        %v1286 = vld [vmem:[#allocation7 + $0x38] sm:$0xff]
        %v1287 = vld [vmem:[#allocation7 + $0x40] sm:$0xff]
        %v1288 = vld [vmem:[#allocation7 + $0x48] sm:$0xff]
        %v1289 = vld [vmem:[#allocation7 + $0x50] sm:$0xff]
        %v1290 = vld [vmem:[#allocation7 + $0x58] sm:$0xff]
        %v1291 = vld [vmem:[#allocation7 + $0x60] sm:$0xff]
        %v1292 = vld [vmem:[#allocation7 + $0x68] sm:$0xff]
        %v1293 = vld [vmem:[#allocation7 + $0x70] sm:$0xff]
        %v1294 = vld [vmem:[#allocation7 + $0x78] sm:$0xff]
        %v1295 = vld [vmem:[#allocation7 + $0x80] sm:$0xff]
        %v1296 = vld [vmem:[#allocation7 + $0x88] sm:$0xff]
        %v1297 = vld [vmem:[#allocation7 + $0x90] sm:$0xff]
        %v1298 = vld [vmem:[#allocation7 + $0x98] sm:$0xff]
        %v1299 = vld [vmem:[#allocation7 + $0xa0] sm:$0xff]
        %v1300 = vld [vmem:[#allocation7 + $0xa8] sm:$0xff]
        %v1301 = vld [vmem:[#allocation7 + $0xb0] sm:$0xff]
        %v1302 = vld [vmem:[#allocation7 + $0xb8] sm:$0xff]
        %v1303 = vld [vmem:[#allocation7 + $0xc0] sm:$0xff]
        %v1304 = vld [vmem:[#allocation7 + $0xc8] sm:$0xff]
        %v1305 = vld [vmem:[#allocation7 + $0xd0] sm:$0xff]
        %v1306 = vld [vmem:[#allocation7 + $0xd8] sm:$0xff]
        %v1307 = vld [vmem:[#allocation7 + $0xe0] sm:$0xff]
        %v1308 = vld [vmem:[#allocation7 + $0xe8] sm:$0xff]
        %v1309 = vld [vmem:[#allocation7 + $0xf0] sm:$0xff]
        %v1310 = vld [vmem:[#allocation7 + $0xf8] sm:$0xff]
        %v1311 = vld [vmem:[#allocation7 + $0x100] sm:$0xff]
        %v1312 = vld [vmem:[#allocation7 + $0x108] sm:$0xff]
        %v1313 = vld [vmem:[#allocation7 + $0x110] sm:$0xff]
        %v1314 = vld [vmem:[#allocation7 + $0x118] sm:$0xff]
        %v1315 = vld [vmem:[#allocation7 + $0x120] sm:$0xff]
        %v1316 = vld [vmem:[#allocation7 + $0x128] sm:$0xff]
        %v1317 = vld [vmem:[#allocation7 + $0x130] sm:$0xff]
        %v1318 = vld [vmem:[#allocation7 + $0x138] sm:$0xff]
        %v1319 = vld [vmem:[#allocation7 + $0x140] sm:$0xff]
        %v1320 = vld [vmem:[#allocation7 + $0x148] sm:$0xff]
        %v1321 = vld [vmem:[#allocation7 + $0x150] sm:$0xff]
        %v1322 = vld [vmem:[#allocation7 + $0x158] sm:$0xff]
        %v1323 = vld [vmem:[#allocation7 + $0x160] sm:$0xff]
        %v1324 = vld [vmem:[#allocation7 + $0x168] sm:$0xff]
        %v1325 = vld [vmem:[#allocation7 + $0x170] sm:$0xff]
        %v1326 = vld [vmem:[#allocation7 + $0x178] sm:$0xff]
        %v1327 = vld [vmem:[#allocation7 + $0x180] sm:$0xff]
        %v1328 = vld [vmem:[#allocation7 + $0x188] sm:$0xff]
        %v1329 = vld [vmem:[#allocation7 + $0x190] sm:$0xff]
        %v1330 = vld [vmem:[#allocation7 + $0x198] sm:$0xff]
        %v1331 = vld [vmem:[#allocation7 + $0x1a0] sm:$0xff]
        %v1332 = vld [vmem:[#allocation7 + $0x1a8] sm:$0xff]
        %v1333 = vld [vmem:[#allocation7 + $0x1b0] sm:$0xff]
        %v1334 = vld [vmem:[#allocation7 + $0x1b8] sm:$0xff]
        %v1335 = vld [vmem:[#allocation7 + $0x1c0] sm:$0xff]
        %v1336 = vld [vmem:[#allocation7 + $0x1c8] sm:$0xff]
        %v1337 = vld [vmem:[#allocation7 + $0x1d0] sm:$0xff]
        %v1338 = vld [vmem:[#allocation7 + $0x1d8] sm:$0xff]
        %v1339 = vld [vmem:[#allocation7 + $0x1e0] sm:$0xff]
        %v1340 = vld [vmem:[#allocation7 + $0x1e8] sm:$0xff]
        %v1341 = vld [vmem:[#allocation7 + $0x1f0] sm:$0xff]
        %v1342 = vld [vmem:[#allocation7 + $0x1f8] sm:$0xff]
        %v1407 = vunpack.c.l.b16 %v1279
        %v1408 = vunpack.c.h.b16 %v1279
        %v1409 = vunpack.c.l.b16 %v1280
        %v1410 = vunpack.c.h.b16 %v1280
        %v1411 = vunpack.c.l.b16 %v1281
        %v1412 = vunpack.c.h.b16 %v1281
        %v1413 = vunpack.c.l.b16 %v1282
        %v1414 = vunpack.c.h.b16 %v1282
        %v1415 = vunpack.c.l.b16 %v1283
        %v1416 = vunpack.c.h.b16 %v1283
        %v1417 = vunpack.c.l.b16 %v1284
        %v1418 = vunpack.c.h.b16 %v1284
        %v1419 = vunpack.c.l.b16 %v1285
        %v1420 = vunpack.c.h.b16 %v1285
        %v1421 = vunpack.c.l.b16 %v1286
        %v1422 = vunpack.c.h.b16 %v1286
        %v1423 = vunpack.c.l.b16 %v1287
        %v1424 = vunpack.c.h.b16 %v1287
        %v1425 = vunpack.c.l.b16 %v1288
        %v1426 = vunpack.c.h.b16 %v1288
        %v1427 = vunpack.c.l.b16 %v1289
        %v1428 = vunpack.c.h.b16 %v1289
        %v1429 = vunpack.c.l.b16 %v1290
        %v1430 = vunpack.c.h.b16 %v1290
        %v1431 = vunpack.c.l.b16 %v1291
        %v1432 = vunpack.c.h.b16 %v1291
        %v1433 = vunpack.c.l.b16 %v1292
        %v1434 = vunpack.c.h.b16 %v1292
        %v1435 = vunpack.c.l.b16 %v1293
        %v1436 = vunpack.c.h.b16 %v1293
        %v1437 = vunpack.c.l.b16 %v1294
        %v1438 = vunpack.c.h.b16 %v1294
        %v1439 = vunpack.c.l.b16 %v1295
        %v1440 = vunpack.c.h.b16 %v1295
        %v1441 = vunpack.c.l.b16 %v1296
        %v1442 = vunpack.c.h.b16 %v1296
        %v1443 = vunpack.c.l.b16 %v1297
        %v1444 = vunpack.c.h.b16 %v1297
        %v1445 = vunpack.c.l.b16 %v1298
        %v1446 = vunpack.c.h.b16 %v1298
        %v1447 = vunpack.c.l.b16 %v1299
        %v1448 = vunpack.c.h.b16 %v1299
        %v1449 = vunpack.c.l.b16 %v1300
        %v1450 = vunpack.c.h.b16 %v1300
        %v1451 = vunpack.c.l.b16 %v1301
        %v1452 = vunpack.c.h.b16 %v1301
        %v1453 = vunpack.c.l.b16 %v1302
        %v1454 = vunpack.c.h.b16 %v1302
        %v1455 = vunpack.c.l.b16 %v1303
        %v1456 = vunpack.c.h.b16 %v1303
        %v1457 = vunpack.c.l.b16 %v1304
        %v1458 = vunpack.c.h.b16 %v1304
        %v1459 = vunpack.c.l.b16 %v1305
        %v1460 = vunpack.c.h.b16 %v1305
        %v1461 = vunpack.c.l.b16 %v1306
        %v1462 = vunpack.c.h.b16 %v1306
        %v1463 = vunpack.c.l.b16 %v1307
        %v1464 = vunpack.c.h.b16 %v1307
        %v1465 = vunpack.c.l.b16 %v1308
        %v1466 = vunpack.c.h.b16 %v1308
        %v1467 = vunpack.c.l.b16 %v1309
        %v1468 = vunpack.c.h.b16 %v1309
        %v1469 = vunpack.c.l.b16 %v1310
        %v1470 = vunpack.c.h.b16 %v1310
        %v1471 = vunpack.c.l.b16 %v1311
        %v1472 = vunpack.c.h.b16 %v1311
        %v1473 = vunpack.c.l.b16 %v1312
        %v1474 = vunpack.c.h.b16 %v1312
        %v1475 = vunpack.c.l.b16 %v1313
        %v1476 = vunpack.c.h.b16 %v1313
        %v1477 = vunpack.c.l.b16 %v1314
        %v1478 = vunpack.c.h.b16 %v1314
        %v1479 = vunpack.c.l.b16 %v1315
        %v1480 = vunpack.c.h.b16 %v1315
        %v1481 = vunpack.c.l.b16 %v1316
        %v1482 = vunpack.c.h.b16 %v1316
        %v1483 = vunpack.c.l.b16 %v1317
        %v1484 = vunpack.c.h.b16 %v1317
        %v1485 = vunpack.c.l.b16 %v1318
        %v1486 = vunpack.c.h.b16 %v1318
        %v1487 = vunpack.c.l.b16 %v1319
        %v1488 = vunpack.c.h.b16 %v1319
        %v1489 = vunpack.c.l.b16 %v1320
        %v1490 = vunpack.c.h.b16 %v1320
        %v1491 = vunpack.c.l.b16 %v1321
        %v1492 = vunpack.c.h.b16 %v1321
        %v1493 = vunpack.c.l.b16 %v1322
        %v1494 = vunpack.c.h.b16 %v1322
        %v1495 = vunpack.c.l.b16 %v1323
        %v1496 = vunpack.c.h.b16 %v1323
        %v1497 = vunpack.c.l.b16 %v1324
        %v1498 = vunpack.c.h.b16 %v1324
        %v1499 = vunpack.c.l.b16 %v1325
        %v1500 = vunpack.c.h.b16 %v1325
        %v1501 = vunpack.c.l.b16 %v1326
        %v1502 = vunpack.c.h.b16 %v1326
        %v1503 = vunpack.c.l.b16 %v1327
        %v1504 = vunpack.c.h.b16 %v1327
        %v1505 = vunpack.c.l.b16 %v1328
        %v1506 = vunpack.c.h.b16 %v1328
        %v1507 = vunpack.c.l.b16 %v1329
        %v1508 = vunpack.c.h.b16 %v1329
        %v1509 = vunpack.c.l.b16 %v1330
        %v1510 = vunpack.c.h.b16 %v1330
        %v1511 = vunpack.c.l.b16 %v1331
        %v1512 = vunpack.c.h.b16 %v1331
        %v1513 = vunpack.c.l.b16 %v1332
        %v1514 = vunpack.c.h.b16 %v1332
        %v1515 = vunpack.c.l.b16 %v1333
        %v1516 = vunpack.c.h.b16 %v1333
        %v1517 = vunpack.c.l.b16 %v1334
        %v1518 = vunpack.c.h.b16 %v1334
        %v1519 = vunpack.c.l.b16 %v1335
        %v1520 = vunpack.c.h.b16 %v1335
        %v1521 = vunpack.c.l.b16 %v1336
        %v1522 = vunpack.c.h.b16 %v1336
        %v1523 = vunpack.c.l.b16 %v1337
        %v1524 = vunpack.c.h.b16 %v1337
        %v1525 = vunpack.c.l.b16 %v1338
        %v1526 = vunpack.c.h.b16 %v1338
        %v1527 = vunpack.c.l.b16 %v1339
        %v1528 = vunpack.c.h.b16 %v1339
        %v1529 = vunpack.c.l.b16 %v1340
        %v1530 = vunpack.c.h.b16 %v1340
        %v1531 = vunpack.c.l.b16 %v1341
        %v1532 = vunpack.c.h.b16 %v1341
        %v1533 = vunpack.c.l.b16 %v1342
        %v1534 = vunpack.c.h.b16 %v1342
        %v1535 = vpack.c.b16 %v1409, %v1407
        %v1536 = vpack.c.b16 %v1410, %v1408
        %v1537 = vpack.c.b16 %v1413, %v1411
        %v1538 = vpack.c.b16 %v1414, %v1412
        %v1539 = vpack.c.b16 %v1417, %v1415
        %v1540 = vpack.c.b16 %v1418, %v1416
        %v1541 = vpack.c.b16 %v1421, %v1419
        %v1542 = vpack.c.b16 %v1422, %v1420
        %v1543 = vpack.c.b16 %v1425, %v1423
        %v1544 = vpack.c.b16 %v1426, %v1424
        %v1545 = vpack.c.b16 %v1429, %v1427
        %v1546 = vpack.c.b16 %v1430, %v1428
        %v1547 = vpack.c.b16 %v1433, %v1431
        %v1548 = vpack.c.b16 %v1434, %v1432
        %v1549 = vpack.c.b16 %v1437, %v1435
        %v1550 = vpack.c.b16 %v1438, %v1436
        %v1551 = vpack.c.b16 %v1441, %v1439
        %v1552 = vpack.c.b16 %v1442, %v1440
        %v1553 = vpack.c.b16 %v1445, %v1443
        %v1554 = vpack.c.b16 %v1446, %v1444
        %v1555 = vpack.c.b16 %v1449, %v1447
        %v1556 = vpack.c.b16 %v1450, %v1448
        %v1557 = vpack.c.b16 %v1453, %v1451
        %v1558 = vpack.c.b16 %v1454, %v1452
        %v1559 = vpack.c.b16 %v1457, %v1455
        %v1560 = vpack.c.b16 %v1458, %v1456
        %v1561 = vpack.c.b16 %v1461, %v1459
        %v1562 = vpack.c.b16 %v1462, %v1460
        %v1563 = vpack.c.b16 %v1465, %v1463
        %v1564 = vpack.c.b16 %v1466, %v1464
        %v1565 = vpack.c.b16 %v1469, %v1467
        %v1566 = vpack.c.b16 %v1470, %v1468
        %v1567 = vpack.c.b16 %v1473, %v1471
        %v1568 = vpack.c.b16 %v1474, %v1472
        %v1569 = vpack.c.b16 %v1477, %v1475
        %v1570 = vpack.c.b16 %v1478, %v1476
        %v1571 = vpack.c.b16 %v1481, %v1479
        %v1572 = vpack.c.b16 %v1482, %v1480
        %v1573 = vpack.c.b16 %v1485, %v1483
        %v1574 = vpack.c.b16 %v1486, %v1484
        %v1575 = vpack.c.b16 %v1489, %v1487
        %v1576 = vpack.c.b16 %v1490, %v1488
        %v1577 = vpack.c.b16 %v1493, %v1491
        %v1578 = vpack.c.b16 %v1494, %v1492
        %v1579 = vpack.c.b16 %v1497, %v1495
        %v1580 = vpack.c.b16 %v1498, %v1496
        %v1581 = vpack.c.b16 %v1501, %v1499
        %v1582 = vpack.c.b16 %v1502, %v1500
        %v1583 = vpack.c.b16 %v1505, %v1503
        %v1584 = vpack.c.b16 %v1506, %v1504
        %v1585 = vpack.c.b16 %v1509, %v1507
        %v1586 = vpack.c.b16 %v1510, %v1508
        %v1587 = vpack.c.b16 %v1513, %v1511
        %v1588 = vpack.c.b16 %v1514, %v1512
        %v1589 = vpack.c.b16 %v1517, %v1515
        %v1590 = vpack.c.b16 %v1518, %v1516
        %v1591 = vpack.c.b16 %v1521, %v1519
        %v1592 = vpack.c.b16 %v1522, %v1520
        %v1593 = vpack.c.b16 %v1525, %v1523
        %v1594 = vpack.c.b16 %v1526, %v1524
        %v1595 = vpack.c.b16 %v1529, %v1527
        %v1596 = vpack.c.b16 %v1530, %v1528
        %v1597 = vpack.c.b16 %v1533, %v1531
        %v1598 = vpack.c.b16 %v1534, %v1532
        %1663 = vmatprep.subr.bf16.mxu0 %v1536
        %1664 = vmatpush1.bf16.msra.mxu0 %v1535
        %1665 = vmatprep.subr.bf16.mxu0 %v1538
        %1666 = vmatpush1.bf16.msra.mxu0 %v1537
        %1667 = vmatprep.subr.bf16.mxu0 %v1540
        %1668 = vmatpush1.bf16.msra.mxu0 %v1539
        %1669 = vmatprep.subr.bf16.mxu0 %v1542
        %1670 = vmatpush1.bf16.msra.mxu0 %v1541
        %1671 = vmatprep.subr.bf16.mxu0 %v1544
        %1672 = vmatpush1.bf16.msra.mxu0 %v1543
        %1673 = vmatprep.subr.bf16.mxu0 %v1546
        %1674 = vmatpush1.bf16.msra.mxu0 %v1545
        %1675 = vmatprep.subr.bf16.mxu0 %v1548
        %1676 = vmatpush1.bf16.msra.mxu0 %v1547
        %1677 = vmatprep.subr.bf16.mxu0 %v1550
        %1678 = vmatpush1.bf16.msra.mxu0 %v1549
        %1679 = vmatprep.subr.bf16.mxu0 %v1552
        %1680 = vmatpush1.bf16.msra.mxu0 %v1551
        %1681 = vmatprep.subr.bf16.mxu0 %v1554
        %1682 = vmatpush1.bf16.msra.mxu0 %v1553
        %1683 = vmatprep.subr.bf16.mxu0 %v1556
        %1684 = vmatpush1.bf16.msra.mxu0 %v1555
        %1685 = vmatprep.subr.bf16.mxu0 %v1558
        %1686 = vmatpush1.bf16.msra.mxu0 %v1557
        %1687 = vmatprep.subr.bf16.mxu0 %v1560
        %1688 = vmatpush1.bf16.msra.mxu0 %v1559
        %1689 = vmatprep.subr.bf16.mxu0 %v1562
        %1690 = vmatpush1.bf16.msra.mxu0 %v1561
        %1691 = vmatprep.subr.bf16.mxu0 %v1564
        %1692 = vmatpush1.bf16.msra.mxu0 %v1563
        %1693 = vmatprep.subr.bf16.mxu0 %v1566
        %1694 = vmatpush1.bf16.msra.mxu0 %v1565
        %1695 = vmatprep.mubr.bf16.mxu0 %v1216
        %1696 = vmatmul.mubr.bf16.gmra.mrb[0].mxu0 %v1215
        %v1697 = vpop.f32.mrb[0].mxu0
        %v1698 = vadd.f32 0.0, %v1697
        %v1699 = vpop.f32.mrb[0].mxu0
        %v1700 = vadd.f32 0.0, %v1699
        %v1701 = vpop.f32.mrb[0].mxu0
        %v1702 = vadd.f32 0.0, %v1701
        %v1703 = vpop.f32.mrb[0].mxu0
        %v1704 = vadd.f32 0.0, %v1703
        %1705 = vmatprep.mubr.bf16.mxu0 %v1220
        %1706 = vmatmul.mubr.bf16.gmra.mrb[0].mxu0 %v1219
        %v1707 = vpop.f32.mrb[0].mxu0
        %v1708 = vadd.f32 0.0, %v1707
        %v1709 = vpop.f32.mrb[0].mxu0
        %v1710 = vadd.f32 0.0, %v1709
        %v1711 = vpop.f32.mrb[0].mxu0
        %v1712 = vadd.f32 0.0, %v1711
        %v1713 = vpop.f32.mrb[0].mxu0
        %v1714 = vadd.f32 0.0, %v1713
        %1715 = vmatprep.mubr.bf16.mxu0 %v1224
        %1716 = vmatmul.mubr.bf16.gmra.mrb[0].mxu0 %v1223
        %v1717 = vpop.f32.mrb[0].mxu0
        %v1718 = vadd.f32 0.0, %v1717
        %v1719 = vpop.f32.mrb[0].mxu0
        %v1720 = vadd.f32 0.0, %v1719
        %v1721 = vpop.f32.mrb[0].mxu0
        %v1722 = vadd.f32 0.0, %v1721
        %v1723 = vpop.f32.mrb[0].mxu0
        %v1724 = vadd.f32 0.0, %v1723
        %1725 = vmatprep.mubr.bf16.mxu0 %v1228
        %1726 = vmatmul.mubr.bf16.gmra.mrb[0].mxu0 %v1227
        %v1727 = vpop.f32.mrb[0].mxu0
        %v1728 = vadd.f32 0.0, %v1727
        %v1729 = vpop.f32.mrb[0].mxu0
        %v1730 = vadd.f32 0.0, %v1729
        %v1731 = vpop.f32.mrb[0].mxu0
        %v1732 = vadd.f32 0.0, %v1731
        %v1733 = vpop.f32.mrb[0].mxu0
        %v1734 = vadd.f32 0.0, %v1733
        %1735 = vmatprep.mubr.bf16.mxu0 %v1232
        %1736 = vmatmul.mubr.bf16.gmra.mrb[0].mxu0 %v1231
        %v1737 = vpop.f32.mrb[0].mxu0
        %v1738 = vadd.f32 0.0, %v1737
        %v1739 = vpop.f32.mrb[0].mxu0
        %v1740 = vadd.f32 0.0, %v1739
        %v1741 = vpop.f32.mrb[0].mxu0
        %v1742 = vadd.f32 0.0, %v1741
        %v1743 = vpop.f32.mrb[0].mxu0
        %v1744 = vadd.f32 0.0, %v1743
        %1745 = vmatprep.mubr.bf16.mxu0 %v1236
        %1746 = vmatmul.mubr.bf16.gmra.mrb[0].mxu0 %v1235
        %v1747 = vpop.f32.mrb[0].mxu0
        %v1748 = vadd.f32 0.0, %v1747
        %v1749 = vpop.f32.mrb[0].mxu0
        %v1750 = vadd.f32 0.0, %v1749
        %v1751 = vpop.f32.mrb[0].mxu0
        %v1752 = vadd.f32 0.0, %v1751
        %v1753 = vpop.f32.mrb[0].mxu0
        %v1754 = vadd.f32 0.0, %v1753
        %1755 = vmatprep.mubr.bf16.mxu0 %v1240
        %1756 = vmatmul.mubr.bf16.gmra.mrb[0].mxu0 %v1239
        %v1757 = vpop.f32.mrb[0].mxu0
        %v1758 = vadd.f32 0.0, %v1757
        %v1759 = vpop.f32.mrb[0].mxu0
        %v1760 = vadd.f32 0.0, %v1759
        %v1761 = vpop.f32.mrb[0].mxu0
        %v1762 = vadd.f32 0.0, %v1761
        %v1763 = vpop.f32.mrb[0].mxu0
        %v1764 = vadd.f32 0.0, %v1763
        %1765 = vmatprep.mubr.bf16.mxu0 %v1244
        %1766 = vmatmul.mubr.bf16.gmra.mrb[0].mxu0 %v1243
        %v1767 = vpop.f32.mrb[0].mxu0
        %v1768 = vadd.f32 0.0, %v1767
        %v1769 = vpop.f32.mrb[0].mxu0
        %v1770 = vadd.f32 0.0, %v1769
        %v1771 = vpop.f32.mrb[0].mxu0
        %v1772 = vadd.f32 0.0, %v1771
        %v1773 = vpop.f32.mrb[0].mxu0
        %v1774 = vadd.f32 0.0, %v1773
        %1775 = vmatprep.mubr.bf16.mxu0 %v1248
        %1776 = vmatmul.mubr.bf16.gmra.mrb[0].mxu0 %v1247
        %v1777 = vpop.f32.mrb[0].mxu0
        %v1778 = vadd.f32 0.0, %v1777
        %v1779 = vpop.f32.mrb[0].mxu0
        %v1780 = vadd.f32 0.0, %v1779
        %v1781 = vpop.f32.mrb[0].mxu0
        %v1782 = vadd.f32 0.0, %v1781
        %v1783 = vpop.f32.mrb[0].mxu0
        %v1784 = vadd.f32 0.0, %v1783
        %1785 = vmatprep.mubr.bf16.mxu0 %v1252
        %1786 = vmatmul.mubr.bf16.gmra.mrb[0].mxu0 %v1251
        %v1787 = vpop.f32.mrb[0].mxu0
        %v1788 = vadd.f32 0.0, %v1787
        %v1789 = vpop.f32.mrb[0].mxu0
        %v1790 = vadd.f32 0.0, %v1789
        %v1791 = vpop.f32.mrb[0].mxu0
        %v1792 = vadd.f32 0.0, %v1791
        %v1793 = vpop.f32.mrb[0].mxu0
        %v1794 = vadd.f32 0.0, %v1793
        %1795 = vmatprep.mubr.bf16.mxu0 %v1256
        %1796 = vmatmul.mubr.bf16.gmra.mrb[0].mxu0 %v1255
        %v1797 = vpop.f32.mrb[0].mxu0
        %v1798 = vadd.f32 0.0, %v1797
        %v1799 = vpop.f32.mrb[0].mxu0
        %v1800 = vadd.f32 0.0, %v1799
        %v1801 = vpop.f32.mrb[0].mxu0
        %v1802 = vadd.f32 0.0, %v1801
        %v1803 = vpop.f32.mrb[0].mxu0
        %v1804 = vadd.f32 0.0, %v1803
        %1805 = vmatprep.mubr.bf16.mxu0 %v1260
        %1806 = vmatmul.mubr.bf16.gmra.mrb[0].mxu0 %v1259
        %v1807 = vpop.f32.mrb[0].mxu0
        %v1808 = vadd.f32 0.0, %v1807
        %v1809 = vpop.f32.mrb[0].mxu0
        %v1810 = vadd.f32 0.0, %v1809
        %v1811 = vpop.f32.mrb[0].mxu0
        %v1812 = vadd.f32 0.0, %v1811
        %v1813 = vpop.f32.mrb[0].mxu0
        %v1814 = vadd.f32 0.0, %v1813
        %1815 = vmatprep.mubr.bf16.mxu0 %v1264
        %1816 = vmatmul.mubr.bf16.gmra.mrb[0].mxu0 %v1263
        %v1817 = vpop.f32.mrb[0].mxu0
        %v1818 = vadd.f32 0.0, %v1817
        %v1819 = vpop.f32.mrb[0].mxu0
        %v1820 = vadd.f32 0.0, %v1819
        %v1821 = vpop.f32.mrb[0].mxu0
        %v1822 = vadd.f32 0.0, %v1821
        %v1823 = vpop.f32.mrb[0].mxu0
        %v1824 = vadd.f32 0.0, %v1823
        %1825 = vmatprep.mubr.bf16.mxu0 %v1268
        %1826 = vmatmul.mubr.bf16.gmra.mrb[0].mxu0 %v1267
        %v1827 = vpop.f32.mrb[0].mxu0
        %v1828 = vadd.f32 0.0, %v1827
        %v1829 = vpop.f32.mrb[0].mxu0
        %v1830 = vadd.f32 0.0, %v1829
        %v1831 = vpop.f32.mrb[0].mxu0
        %v1832 = vadd.f32 0.0, %v1831
        %v1833 = vpop.f32.mrb[0].mxu0
        %v1834 = vadd.f32 0.0, %v1833
        %1835 = vmatprep.mubr.bf16.mxu0 %v1272
        %1836 = vmatmul.mubr.bf16.gmra.mrb[0].mxu0 %v1271
        %v1837 = vpop.f32.mrb[0].mxu0
        %v1838 = vadd.f32 0.0, %v1837
        %v1839 = vpop.f32.mrb[0].mxu0
        %v1840 = vadd.f32 0.0, %v1839
        %v1841 = vpop.f32.mrb[0].mxu0
        %v1842 = vadd.f32 0.0, %v1841
        %v1843 = vpop.f32.mrb[0].mxu0
        %v1844 = vadd.f32 0.0, %v1843
        %1845 = vmatprep.mubr.bf16.mxu0 %v1276
        %1846 = vmatmul.mubr.bf16.gmra.mrb[0].mxu0 %v1275
        %v1847 = vpop.f32.mrb[0].mxu0
        %v1848 = vadd.f32 0.0, %v1847
        %v1849 = vpop.f32.mrb[0].mxu0
        %v1850 = vadd.f32 0.0, %v1849
        %v1851 = vpop.f32.mrb[0].mxu0
        %v1852 = vadd.f32 0.0, %v1851
        %v1853 = vpop.f32.mrb[0].mxu0
        %v1854 = vadd.f32 0.0, %v1853
        %1855 = vdwg.mxu0
        %1856 = vmatprep.subr.bf16.mxu0 %v1568
        %1857 = vmatpush1.bf16.msra.mxu0 %v1567
        %1858 = vmatprep.subr.bf16.mxu0 %v1570
        %1859 = vmatpush1.bf16.msra.mxu0 %v1569
        %1860 = vmatprep.subr.bf16.mxu0 %v1572
        %1861 = vmatpush1.bf16.msra.mxu0 %v1571
        %1862 = vmatprep.subr.bf16.mxu0 %v1574
        %1863 = vmatpush1.bf16.msra.mxu0 %v1573
        %1864 = vmatprep.subr.bf16.mxu0 %v1576
        %1865 = vmatpush1.bf16.msra.mxu0 %v1575
        %1866 = vmatprep.subr.bf16.mxu0 %v1578
        %1867 = vmatpush1.bf16.msra.mxu0 %v1577
        %1868 = vmatprep.subr.bf16.mxu0 %v1580
        %1869 = vmatpush1.bf16.msra.mxu0 %v1579
        %1870 = vmatprep.subr.bf16.mxu0 %v1582
        %1871 = vmatpush1.bf16.msra.mxu0 %v1581
        %1872 = vmatprep.subr.bf16.mxu0 %v1584
        %1873 = vmatpush1.bf16.msra.mxu0 %v1583
        %1874 = vmatprep.subr.bf16.mxu0 %v1586
        %1875 = vmatpush1.bf16.msra.mxu0 %v1585
        %1876 = vmatprep.subr.bf16.mxu0 %v1588
        %1877 = vmatpush1.bf16.msra.mxu0 %v1587
        %1878 = vmatprep.subr.bf16.mxu0 %v1590
        %1879 = vmatpush1.bf16.msra.mxu0 %v1589
        %1880 = vmatprep.subr.bf16.mxu0 %v1592
        %1881 = vmatpush1.bf16.msra.mxu0 %v1591
        %1882 = vmatprep.subr.bf16.mxu0 %v1594
        %1883 = vmatpush1.bf16.msra.mxu0 %v1593
        %1884 = vmatprep.subr.bf16.mxu0 %v1596
        %1885 = vmatpush1.bf16.msra.mxu0 %v1595
        %1886 = vmatprep.subr.bf16.mxu0 %v1598
        %1887 = vmatpush1.bf16.msra.mxu0 %v1597
        %1888 = vmatprep.mubr.bf16.mxu0 %v1218
        %1889 = vmatmul.mubr.bf16.gmra.mrb[0].mxu0 %v1217
        %v1890 = vpop.f32.mrb[0].mxu0
        %v1891 = vadd.f32 %v1698, %v1890
        %v1892 = vpop.f32.mrb[0].mxu0
        %v1893 = vadd.f32 %v1700, %v1892
        %v1894 = vpop.f32.mrb[0].mxu0
        %v1895 = vadd.f32 %v1702, %v1894
        %v1896 = vpop.f32.mrb[0].mxu0
        %v1897 = vadd.f32 %v1704, %v1896
        %1898 = vmatprep.mubr.bf16.mxu0 %v1222
        %1899 = vmatmul.mubr.bf16.gmra.mrb[0].mxu0 %v1221
        %v1900 = vpop.f32.mrb[0].mxu0
        %v1901 = vadd.f32 %v1708, %v1900
        %v1902 = vpop.f32.mrb[0].mxu0
        %v1903 = vadd.f32 %v1710, %v1902
        %v1904 = vpop.f32.mrb[0].mxu0
        %v1905 = vadd.f32 %v1712, %v1904
        %v1906 = vpop.f32.mrb[0].mxu0
        %v1907 = vadd.f32 %v1714, %v1906
        %1908 = vmatprep.mubr.bf16.mxu0 %v1226
        %1909 = vmatmul.mubr.bf16.gmra.mrb[0].mxu0 %v1225
        %v1910 = vpop.f32.mrb[0].mxu0
        %v1911 = vadd.f32 %v1718, %v1910
        %v1912 = vpop.f32.mrb[0].mxu0
        %v1913 = vadd.f32 %v1720, %v1912
        %v1914 = vpop.f32.mrb[0].mxu0
        %v1915 = vadd.f32 %v1722, %v1914
        %v1916 = vpop.f32.mrb[0].mxu0
        %v1917 = vadd.f32 %v1724, %v1916
        %1918 = vmatprep.mubr.bf16.mxu0 %v1230
        %1919 = vmatmul.mubr.bf16.gmra.mrb[0].mxu0 %v1229
        %v1920 = vpop.f32.mrb[0].mxu0
        %v1921 = vadd.f32 %v1728, %v1920
        %v1922 = vpop.f32.mrb[0].mxu0
        %v1923 = vadd.f32 %v1730, %v1922
        %v1924 = vpop.f32.mrb[0].mxu0
        %v1925 = vadd.f32 %v1732, %v1924
        %v1926 = vpop.f32.mrb[0].mxu0
        %v1927 = vadd.f32 %v1734, %v1926
        %1928 = vmatprep.mubr.bf16.mxu0 %v1234
        %1929 = vmatmul.mubr.bf16.gmra.mrb[0].mxu0 %v1233
        %v1930 = vpop.f32.mrb[0].mxu0
        %v1931 = vadd.f32 %v1738, %v1930
        %v1932 = vpop.f32.mrb[0].mxu0
        %v1933 = vadd.f32 %v1740, %v1932
        %v1934 = vpop.f32.mrb[0].mxu0
        %v1935 = vadd.f32 %v1742, %v1934
        %v1936 = vpop.f32.mrb[0].mxu0
        %v1937 = vadd.f32 %v1744, %v1936
        %1938 = vmatprep.mubr.bf16.mxu0 %v1238
        %1939 = vmatmul.mubr.bf16.gmra.mrb[0].mxu0 %v1237
        %v1940 = vpop.f32.mrb[0].mxu0
        %v1941 = vadd.f32 %v1748, %v1940
        %v1942 = vpop.f32.mrb[0].mxu0
        %v1943 = vadd.f32 %v1750, %v1942
        %v1944 = vpop.f32.mrb[0].mxu0
        %v1945 = vadd.f32 %v1752, %v1944
        %v1946 = vpop.f32.mrb[0].mxu0
        %v1947 = vadd.f32 %v1754, %v1946
        %1948 = vmatprep.mubr.bf16.mxu0 %v1242
        %1949 = vmatmul.mubr.bf16.gmra.mrb[0].mxu0 %v1241
        %v1950 = vpop.f32.mrb[0].mxu0
        %v1951 = vadd.f32 %v1758, %v1950
        %v1952 = vpop.f32.mrb[0].mxu0
        %v1953 = vadd.f32 %v1760, %v1952
        %v1954 = vpop.f32.mrb[0].mxu0
        %v1955 = vadd.f32 %v1762, %v1954
        %v1956 = vpop.f32.mrb[0].mxu0
        %v1957 = vadd.f32 %v1764, %v1956
        %1958 = vmatprep.mubr.bf16.mxu0 %v1246
        %1959 = vmatmul.mubr.bf16.gmra.mrb[0].mxu0 %v1245
        %v1960 = vpop.f32.mrb[0].mxu0
        %v1961 = vadd.f32 %v1768, %v1960
        %v1962 = vpop.f32.mrb[0].mxu0
        %v1963 = vadd.f32 %v1770, %v1962
        %v1964 = vpop.f32.mrb[0].mxu0
        %v1965 = vadd.f32 %v1772, %v1964
        %v1966 = vpop.f32.mrb[0].mxu0
        %v1967 = vadd.f32 %v1774, %v1966
        %1968 = vmatprep.mubr.bf16.mxu0 %v1250
        %1969 = vmatmul.mubr.bf16.gmra.mrb[0].mxu0 %v1249
        %v1970 = vpop.f32.mrb[0].mxu0
        %v1971 = vadd.f32 %v1778, %v1970
        %v1972 = vpop.f32.mrb[0].mxu0
        %v1973 = vadd.f32 %v1780, %v1972
        %v1974 = vpop.f32.mrb[0].mxu0
        %v1975 = vadd.f32 %v1782, %v1974
        %v1976 = vpop.f32.mrb[0].mxu0
        %v1977 = vadd.f32 %v1784, %v1976
        %1978 = vmatprep.mubr.bf16.mxu0 %v1254
        %1979 = vmatmul.mubr.bf16.gmra.mrb[0].mxu0 %v1253
        %v1980 = vpop.f32.mrb[0].mxu0
        %v1981 = vadd.f32 %v1788, %v1980
        %v1982 = vpop.f32.mrb[0].mxu0
        %v1983 = vadd.f32 %v1790, %v1982
        %v1984 = vpop.f32.mrb[0].mxu0
        %v1985 = vadd.f32 %v1792, %v1984
        %v1986 = vpop.f32.mrb[0].mxu0
        %v1987 = vadd.f32 %v1794, %v1986
        %1988 = vmatprep.mubr.bf16.mxu0 %v1258
        %1989 = vmatmul.mubr.bf16.gmra.mrb[0].mxu0 %v1257
        %v1990 = vpop.f32.mrb[0].mxu0
        %v1991 = vadd.f32 %v1798, %v1990
        %v1992 = vpop.f32.mrb[0].mxu0
        %v1993 = vadd.f32 %v1800, %v1992
        %v1994 = vpop.f32.mrb[0].mxu0
        %v1995 = vadd.f32 %v1802, %v1994
        %v1996 = vpop.f32.mrb[0].mxu0
        %v1997 = vadd.f32 %v1804, %v1996
        %1998 = vmatprep.mubr.bf16.mxu0 %v1262
        %1999 = vmatmul.mubr.bf16.gmra.mrb[0].mxu0 %v1261
        %v2000 = vpop.f32.mrb[0].mxu0
        %v2001 = vadd.f32 %v1808, %v2000
        %v2002 = vpop.f32.mrb[0].mxu0
        %v2003 = vadd.f32 %v1810, %v2002
        %v2004 = vpop.f32.mrb[0].mxu0
        %v2005 = vadd.f32 %v1812, %v2004
        %v2006 = vpop.f32.mrb[0].mxu0
        %v2007 = vadd.f32 %v1814, %v2006
        %2008 = vmatprep.mubr.bf16.mxu0 %v1266
        %2009 = vmatmul.mubr.bf16.gmra.mrb[0].mxu0 %v1265
        %v2010 = vpop.f32.mrb[0].mxu0
        %v2011 = vadd.f32 %v1818, %v2010
        %v2012 = vpop.f32.mrb[0].mxu0
        %v2013 = vadd.f32 %v1820, %v2012
        %v2014 = vpop.f32.mrb[0].mxu0
        %v2015 = vadd.f32 %v1822, %v2014
        %v2016 = vpop.f32.mrb[0].mxu0
        %v2017 = vadd.f32 %v1824, %v2016
        %2018 = vmatprep.mubr.bf16.mxu0 %v1270
        %2019 = vmatmul.mubr.bf16.gmra.mrb[0].mxu0 %v1269
        %v2020 = vpop.f32.mrb[0].mxu0
        %v2021 = vadd.f32 %v1828, %v2020
        %v2022 = vpop.f32.mrb[0].mxu0
        %v2023 = vadd.f32 %v1830, %v2022
        %v2024 = vpop.f32.mrb[0].mxu0
        %v2025 = vadd.f32 %v1832, %v2024
        %v2026 = vpop.f32.mrb[0].mxu0
        %v2027 = vadd.f32 %v1834, %v2026
        %2028 = vmatprep.mubr.bf16.mxu0 %v1274
        %2029 = vmatmul.mubr.bf16.gmra.mrb[0].mxu0 %v1273
        %v2030 = vpop.f32.mrb[0].mxu0
        %v2031 = vadd.f32 %v1838, %v2030
        %v2032 = vpop.f32.mrb[0].mxu0
        %v2033 = vadd.f32 %v1840, %v2032
        %v2034 = vpop.f32.mrb[0].mxu0
        %v2035 = vadd.f32 %v1842, %v2034
        %v2036 = vpop.f32.mrb[0].mxu0
        %v2037 = vadd.f32 %v1844, %v2036
        %2038 = vmatprep.mubr.bf16.mxu0 %v1278
        %2039 = vmatmul.mubr.bf16.gmra.mrb[0].mxu0 %v1277
        %v2040 = vpop.f32.mrb[0].mxu0
        %v2041 = vadd.f32 %v1848, %v2040
        %v2042 = vpop.f32.mrb[0].mxu0
        %v2043 = vadd.f32 %v1850, %v2042
        %v2044 = vpop.f32.mrb[0].mxu0
        %v2045 = vadd.f32 %v1852, %v2044
        %v2046 = vpop.f32.mrb[0].mxu0
        %v2047 = vadd.f32 %v1854, %v2046
        %2048 = vdwg.mxu0
        %2049 = vst [vmem:[%s218] sm:$0xff] %v1891
        %2050 = vst [vmem:[%s218 + $0x8] sm:$0xff] %v1893
        %2051 = vst [vmem:[%s218 + $0x10] sm:$0xff] %v1895
        %2052 = vst [vmem:[%s218 + $0x18] sm:$0xff] %v1897
        %2053 = vst [vmem:[%s218 + $0x20] sm:$0xff] %v1901
        %2054 = vst [vmem:[%s218 + $0x28] sm:$0xff] %v1903
        %2055 = vst [vmem:[%s218 + $0x30] sm:$0xff] %v1905
        %2056 = vst [vmem:[%s218 + $0x38] sm:$0xff] %v1907
        %2057 = vst [vmem:[%s218 + $0x40] sm:$0xff] %v1911
        %2058 = vst [vmem:[%s218 + $0x48] sm:$0xff] %v1913
        %2059 = vst [vmem:[%s218 + $0x50] sm:$0xff] %v1915
        %2060 = vst [vmem:[%s218 + $0x58] sm:$0xff] %v1917
        %2061 = vst [vmem:[%s218 + $0x60] sm:$0xff] %v1921
        %2062 = vst [vmem:[%s218 + $0x68] sm:$0xff] %v1923
        %2063 = vst [vmem:[%s218 + $0x70] sm:$0xff] %v1925
        %2064 = vst [vmem:[%s218 + $0x78] sm:$0xff] %v1927
        %2065 = vst [vmem:[%s218 + $0x80] sm:$0xff] %v1931
        %2066 = vst [vmem:[%s218 + $0x88] sm:$0xff] %v1933
        %2067 = vst [vmem:[%s218 + $0x90] sm:$0xff] %v1935
        %2068 = vst [vmem:[%s218 + $0x98] sm:$0xff] %v1937
        %2069 = vst [vmem:[%s218 + $0xa0] sm:$0xff] %v1941
        %2070 = vst [vmem:[%s218 + $0xa8] sm:$0xff] %v1943
        %2071 = vst [vmem:[%s218 + $0xb0] sm:$0xff] %v1945
        %2072 = vst [vmem:[%s218 + $0xb8] sm:$0xff] %v1947
        %2073 = vst [vmem:[%s218 + $0xc0] sm:$0xff] %v1951
        %2074 = vst [vmem:[%s218 + $0xc8] sm:$0xff] %v1953
        %2075 = vst [vmem:[%s218 + $0xd0] sm:$0xff] %v1955
        %2076 = vst [vmem:[%s218 + $0xd8] sm:$0xff] %v1957
        %2077 = vst [vmem:[%s218 + $0xe0] sm:$0xff] %v1961
        %2078 = vst [vmem:[%s218 + $0xe8] sm:$0xff] %v1963
        %2079 = vst [vmem:[%s218 + $0xf0] sm:$0xff] %v1965
        %2080 = vst [vmem:[%s218 + $0xf8] sm:$0xff] %v1967
        %2081 = vst [vmem:[%s218 + $0x100] sm:$0xff] %v1971
        %2082 = vst [vmem:[%s218 + $0x108] sm:$0xff] %v1973
        %2083 = vst [vmem:[%s218 + $0x110] sm:$0xff] %v1975
        %2084 = vst [vmem:[%s218 + $0x118] sm:$0xff] %v1977
        %2085 = vst [vmem:[%s218 + $0x120] sm:$0xff] %v1981
        %2086 = vst [vmem:[%s218 + $0x128] sm:$0xff] %v1983
        %2087 = vst [vmem:[%s218 + $0x130] sm:$0xff] %v1985
        %2088 = vst [vmem:[%s218 + $0x138] sm:$0xff] %v1987
        %2089 = vst [vmem:[%s218 + $0x140] sm:$0xff] %v1991
        %2090 = vst [vmem:[%s218 + $0x148] sm:$0xff] %v1993
        %2091 = vst [vmem:[%s218 + $0x150] sm:$0xff] %v1995
        %2092 = vst [vmem:[%s218 + $0x158] sm:$0xff] %v1997
        %2093 = vst [vmem:[%s218 + $0x160] sm:$0xff] %v2001
        %2094 = vst [vmem:[%s218 + $0x168] sm:$0xff] %v2003
        %2095 = vst [vmem:[%s218 + $0x170] sm:$0xff] %v2005
        %2096 = vst [vmem:[%s218 + $0x178] sm:$0xff] %v2007
        %2097 = vst [vmem:[%s218 + $0x180] sm:$0xff] %v2011
        %2098 = vst [vmem:[%s218 + $0x188] sm:$0xff] %v2013
        %2099 = vst [vmem:[%s218 + $0x190] sm:$0xff] %v2015
        %2100 = vst [vmem:[%s218 + $0x198] sm:$0xff] %v2017
        %2101 = vst [vmem:[%s218 + $0x1a0] sm:$0xff] %v2021
        %2102 = vst [vmem:[%s218 + $0x1a8] sm:$0xff] %v2023
        %2103 = vst [vmem:[%s218 + $0x1b0] sm:$0xff] %v2025
        %2104 = vst [vmem:[%s218 + $0x1b8] sm:$0xff] %v2027
        %2105 = vst [vmem:[%s218 + $0x1c0] sm:$0xff] %v2031
        %2106 = vst [vmem:[%s218 + $0x1c8] sm:$0xff] %v2033
        %2107 = vst [vmem:[%s218 + $0x1d0] sm:$0xff] %v2035
        %2108 = vst [vmem:[%s218 + $0x1d8] sm:$0xff] %v2037
        %2109 = vst [vmem:[%s218 + $0x1e0] sm:$0xff] %v2041
        %2110 = vst [vmem:[%s218 + $0x1e8] sm:$0xff] %v2043
        %2111 = vst [vmem:[%s218 + $0x1f0] sm:$0xff] %v2045
        %2112 = vst [vmem:[%s218 + $0x1f8] sm:$0xff] %v2047
        %s2113 = sand.u32 %s97, 1
        %s2114 = scalar_lea.sflag [#allocation4], %s2113
        %s2115 = sand.u32 %s97, 1
        %s2116 = smul.addr %s2115, 512
        %s2117 = scalar_lea.vmem [#allocation8], %s2116
        // Predicated region
        $region45: #{mlp_forward.1} parent=31 // pred_check
          %p2118 = pneg %p107
        $region46: #{mlp_forward.1} parent=31 // pred_check_branch
          %2120 = sbr.rel (%p2118) target = $region48
        $region47: #{mlp_forward.1} parent=31 // pred_region
          %s2121 = smul.u32 32, %s21
          %s2123 = ssub.s32 8192, 8192
          %2124 = vsyncadd %s2114, %s2123
          %s2125 = smul.addr %s2121, 2
          %s2126 = smul.addr %s2125, 128
          %s2127 = scalar_lea.hbm %s3, %s2126
          %s2128 = sshll.u32 %s2117, 4
          %s2129 = int_to_ptr.vmem [resolvable:$true] %s2128
          %2134 = dma.vmem_to_hbm [thread:$0]  %s2129, 8192, %s2127, %s2114, 256, 256, 16
        $region48: #{mlp_forward.1} parent=31 // pred_fallthru
          _
      $region32: #{mlp_forward.1} parent=5 // pred_fallthru
        _
      %p2135 = scmp.le.s32.totalorder 2, %s16
      // Predicated region
      $region49: #{mlp_forward.1} parent=5 // pred_check
        %p2136 = pneg %p2135
      $region50: #{mlp_forward.1} parent=5 // pred_check_branch
        %2138 = sbr.rel (%p2136) target = $region52
      $region51: #{mlp_forward.1} parent=5 // pred_region
        %s2139 = ssub.s32 %s16, 2
        // Predicated region
        $region53: #{mlp_forward.1} parent=51 // pred_check
          %p2140 = pneg %p113
        $region54: #{mlp_forward.1} parent=51 // pred_check_branch
          %2142 = sbr.rel (%p2140) target = $region56
        $region55: #{mlp_forward.1} parent=51 // pred_region
          %s2143 = sand.u32 %s98, 1
          %s2144 = scalar_lea.sflag [#allocation4], %s2143
          %s2145 = sand.u32 %s98, 1
          %s2146 = smul.addr %s2145, 512
          %s2147 = scalar_lea.vmem [#allocation8], %s2146
          %2148 = dma.done %s2144, 8192
        $region56: #{mlp_forward.1} parent=51 // pred_fallthru
          _
      $region52: #{mlp_forward.1} parent=5 // pred_fallthru
        _
    $region6: #{mlp_forward.1} parent=1 // loop_footer
      %s20 = sadd.s32 1, %s16
    $region7: #{mlp_forward.1} parent=1 // loop_footer_branch
      %15 = sbr.rel target = $region3
    $region8: #{mlp_forward.1} parent=1 // loop_exit
      _
    %2149 = vsyncpa [#allocation3], 1
    %s2150 = scalar_lea.sflag [#allocation3], 1
    %2151 = vsyncpa %s2150, 1
    %2152 = vsyncpa [#allocation6], 1
    %2153 = vsyncpa [#allocation4], 1
    %s2154 = scalar_lea.sflag [#allocation4], 1
    %2155 = vsyncpa %s2154, 1

</llo_original>
